<compile_context>
chip_gen: v7x
topology: tpu7x:2x2x1
jax: 0.10.0
libtpu: 0.0.40
codegen_flags: <defaults>
</compile_context>

<pallas_src>
import functools

import jax
import jax.numpy as jnp
from jax import lax
from jax.experimental import pallas as pl
from jax.experimental.pallas import tpu as pltpu

EPS = 1e-5
DIMS = [16, 32, 16, 8, 5]          # true feature dims through the network
FIN = [16, 32, 16, 8]              # linear-layer input dims
FOUT_PAD = [32, 16, 8, 8]          # linear-layer output dims (last padded 5 -> 8)
W_ROW_START = [0, 32, 48, 56]      # sublane row offsets of W1..W4 in the weight slab
# Per-feature vector slab column layout (each column holds one (F,) vector,
# zero-padded to 32 rows):
#   col 0: gamma of BN0, col 1: beta of BN0
#   for layer k in 0..3:  col 2+3k: linear bias, col 3+3k: gamma, col 4+3k: beta


def _mlp_kernel(x_ref, vecs_ref, wts_ref, o_ref, *, n_valid, n_pad):
    """x_ref: (16, n_pad)  vecs_ref: (32, 16)  wts_ref: (64, 32)  o_ref: (8, n_pad)."""
    inv_n = jnp.float32(1.0 / n_valid)
    # 0/1 column selecting the valid batch lanes; used as the reduction vector
    # so the lane padding never pollutes the batch statistics.  Computed once.
    mask = (lax.broadcasted_iota(jnp.int32, (n_pad, 1), 0) < n_valid
            ).astype(jnp.float32)                                  # (n_pad, 1)

    def bn_relu(h, f, gcol, bcol):
        gamma = vecs_ref[0:f, gcol:gcol + 1]                       # (f, 1)
        beta = vecs_ref[0:f, bcol:bcol + 1]                        # (f, 1)
        # one-pass batch statistics, reductions done on the (idle) MXU
        s1 = jnp.dot(h, mask, preferred_element_type=jnp.float32)       # (f, 1)
        s2 = jnp.dot(h * h, mask, preferred_element_type=jnp.float32)   # (f, 1)
        mean = s1 * inv_n
        var = s2 * inv_n - mean * mean                             # biased variance
        scale = gamma * lax.rsqrt(var + EPS)
        shift = beta - mean * scale
        # BN + affine folded into a single FMA, then ReLU
        return jnp.maximum(h * scale + shift, 0.0)

    h = x_ref[...]                                                 # (16, n_pad)
    h = bn_relu(h, DIMS[0], 0, 1)                                  # BN(16) + ReLU

    for k in range(4):                                             # unrolled at trace time
        fin, fout = FIN[k], FOUT_PAD[k]
        r = W_ROW_START[k]
        w = wts_ref[r:r + fout, 0:fin]                             # (fout, fin)
        c = vecs_ref[0:fout, 2 + 3 * k:3 + 3 * k]                  # (fout, 1)
        h = jnp.dot(w, h, preferred_element_type=jnp.float32) + c  # Linear
        h = bn_relu(h, fout, 3 + 3 * k, 4 + 3 * k)                 # BN + ReLU
        # (for k == 3, rows 5..7 of w / gamma / beta are zero, so the padded
        #  output rows are identically zero and the final store is unmasked)

    o_ref[...] = h.astype(o_ref.dtype)                             # (8, n_pad), lane-dense


@jax.jit
def test_forward(x, vecs, wts):
    """x: (N, 16) f32; vecs/wts: packed parameter slabs. Returns (N, 5)."""
    n = x.shape[0]
    n_pad = ((n + 127) // 128) * 128                 # batch padded into the lane dim

    # layout plumbing in the wrapper: transpose to (F, N) and pad lanes
    xt = jnp.pad(jnp.transpose(x).astype(jnp.float32), ((0, 0), (0, n_pad - n)))

    kernel = functools.partial(_mlp_kernel, n_valid=n, n_pad=n_pad)
    vmem = pl.BlockSpec(memory_space=pltpu.MemorySpace.VMEM)
    out_t = pl.pallas_call(
        kernel,
        out_shape=jax.ShapeDtypeStruct((8, n_pad), jnp.float32),
        in_specs=[vmem, vmem, vmem],
        out_specs=vmem,
    )(xt, vecs, wts)

    return jnp.transpose(out_t[:5, :n])              # back to PyTorch's (N, 5)


def make_raw_params(key):
    """Deterministic synthetic parameters with PyTorch-consistent shapes.

    BN:     gamma (F,), beta (F,)
    Linear: weight (out, in), bias (out,)
    """
    keys = iter(jax.random.split(key, 32))
    bn = []
    for f in DIMS:
        g = 1.0 + 0.1 * jax.random.normal(next(keys), (f,), jnp.float32)
        b = 0.1 * jax.random.normal(next(keys), (f,), jnp.float32)
        bn.append((g, b))
    lin = []
    for fin, fout in zip(DIMS[:-1], DIMS[1:]):
        bound = 1.0 / float(fin) ** 0.5
        w = jax.random.uniform(next(keys), (fout, fin), jnp.float32, -bound, bound)
        c = jax.random.uniform(next(keys), (fout,), jnp.float32, -bound, bound)
        lin.append((w, c))
    return bn, lin


def pack_params(raw):
    """Pack the 18 small parameter arrays into two VMEM-friendly slabs.

    Unused rows/columns (including the 5->8 padding of the last layer) stay
    zero, which is exactly what the kernel relies on.
    """
    bn, lin = raw
    vecs = jnp.zeros((32, 16), jnp.float32)
    wts = jnp.zeros((64, 32), jnp.float32)

    g0, b0 = bn[0]
    vecs = vecs.at[:DIMS[0], 0].set(g0).at[:DIMS[0], 1].set(b0)

    for k in range(4):
        fin, fout = DIMS[k], DIMS[k + 1]
        w, c = lin[k]
        g, b = bn[k + 1]
        r = W_ROW_START[k]
        wts = wts.at[r:r + fout, :fin].set(w)
        vecs = vecs.at[:fout, 2 + 3 * k].set(c)
        vecs = vecs.at[:fout, 3 + 3 * k].set(g)
        vecs = vecs.at[:fout, 4 + 3 * k].set(b)
    return vecs, wts


def reference_forward(x, raw):
    """Pure-JAX reference with the PyTorch (training-mode BN) semantics."""
    bn, lin = raw

    def bn_relu(h, g, b):
        mu = jnp.mean(h, axis=0, keepdims=True)
        var = jnp.mean((h - mu) ** 2, axis=0, keepdims=True)
        return jnp.maximum((h - mu) / jnp.sqrt(var + EPS) * g + b, 0.0)

    h = bn_relu(x, *bn[0])
    for k in range(4):
        w, c = lin[k]
        h = bn_relu(h @ w.T + c, *bn[k + 1])
    return h


if __name__ == "__main__":
    key = jax.random.PRNGKey(0)
    kx, kp = jax.random.split(key)

    N = 8                                            # small batch for the demo
    x = jax.random.normal(kx, (N, 16), jnp.float32)
    raw = make_raw_params(kp)
    vecs, wts = pack_params(raw)

    out = jax.block_until_ready(test_forward(x, vecs, wts))
    ref = reference_forward(x, raw)

    assert out.shape == (N, 5)
    assert jnp.allclose(out, ref, atol=1e-3, rtol=1e-3), float(jnp.max(jnp.abs(out - ref)))

    print("KERNEL_OK")
</pallas_src>

<mosaic_0001>
module attributes {stable_mosaic.version = 11 : i64} {
  func.func @_mlp_kernel(%arg0: memref<16x128xf32, #tpu.memory_space<vmem>>, %arg1: memref<32x16xf32, #tpu.memory_space<vmem>>, %arg2: memref<64x32xf32, #tpu.memory_space<vmem>>, %arg3: memref<8x128xf32, #tpu.memory_space<vmem>>) attributes {dimension_semantics = [], scalar_prefetch = 0 : i64, scratch_operands = 0 : i64, tpu.core_type = #tpu.core_type<tc>} {
    %0 = tpu.iota {dimensions = array<i32: 0>} : vector<128x1xi32>
    %c8_i32 = arith.constant 8 : i32
    %1 = vector.broadcast %c8_i32 : i32 to vector<128x1xi32>
    %2 = arith.cmpi slt, %0, %1 : vector<128x1xi32>
    %3 = arith.extui %2 : vector<128x1xi1> to vector<128x1xi32>
    %4 = arith.sitofp %3 : vector<128x1xi32> to vector<128x1xf32>
    %c0 = arith.constant 0 : index
    %c0_0 = arith.constant 0 : index
    %5 = vector.load %arg0[%c0, %c0_0] : memref<16x128xf32, #tpu.memory_space<vmem>>, vector<16x128xf32>
    %c0_1 = arith.constant 0 : index
    %c0_2 = arith.constant 0 : index
    %6 = vector.load %arg1[%c0_1, %c0_2] : memref<32x16xf32, #tpu.memory_space<vmem>>, vector<16x1xf32>
    %c0_3 = arith.constant 0 : index
    %c1 = arith.constant 1 : index
    %7 = vector.load %arg1[%c0_3, %c1] : memref<32x16xf32, #tpu.memory_space<vmem>>, vector<16x1xf32>
    %cst = arith.constant dense<0.000000e+00> : vector<16x1xf32>
    %8 = tpu.matmul %5, %4, %cst {dimension_numbers = #tpu.dot_dimension_numbers<[1], [0], [0], [1], [0, 0, 1, 1], [], []>} : vector<16x128xf32>, vector<128x1xf32>, vector<16x1xf32> -> vector<16x1xf32>
    %9 = arith.mulf %5, %5 : vector<16x128xf32>
    %cst_4 = arith.constant dense<0.000000e+00> : vector<16x1xf32>
    %10 = tpu.matmul %9, %4, %cst_4 {dimension_numbers = #tpu.dot_dimension_numbers<[1], [0], [0], [1], [0, 0, 1, 1], [], []>} : vector<16x128xf32>, vector<128x1xf32>, vector<16x1xf32> -> vector<16x1xf32>
    %cst_5 = arith.constant 1.250000e-01 : f32
    %11 = vector.broadcast %cst_5 : f32 to vector<16x1xf32>
    %12 = arith.mulf %8, %11 : vector<16x1xf32>
    %cst_6 = arith.constant 1.250000e-01 : f32
    %13 = vector.broadcast %cst_6 : f32 to vector<16x1xf32>
    %14 = arith.mulf %10, %13 : vector<16x1xf32>
    %15 = arith.mulf %12, %12 : vector<16x1xf32>
    %16 = arith.subf %14, %15 : vector<16x1xf32>
    %cst_7 = arith.constant 9.99999974E-6 : f32
    %17 = vector.broadcast %cst_7 : f32 to vector<16x1xf32>
    %18 = arith.addf %16, %17 : vector<16x1xf32>
    %19 = math.rsqrt %18 : vector<16x1xf32>
    %20 = arith.mulf %6, %19 : vector<16x1xf32>
    %21 = arith.mulf %12, %20 : vector<16x1xf32>
    %22 = arith.subf %7, %21 : vector<16x1xf32>
    %23 = vector.broadcast %20 : vector<16x1xf32> to vector<16x128xf32>
    %24 = arith.mulf %5, %23 : vector<16x128xf32>
    %25 = vector.broadcast %22 : vector<16x1xf32> to vector<16x128xf32>
    %26 = arith.addf %24, %25 : vector<16x128xf32>
    %cst_8 = arith.constant 0.000000e+00 : f32
    %27 = vector.broadcast %cst_8 : f32 to vector<16x128xf32>
    %28 = arith.maximumf %26, %27 : vector<16x128xf32>
    %c0_9 = arith.constant 0 : index
    %c0_10 = arith.constant 0 : index
    %29 = vector.load %arg2[%c0_9, %c0_10] : memref<64x32xf32, #tpu.memory_space<vmem>>, vector<32x16xf32>
    %c0_11 = arith.constant 0 : index
    %c2 = arith.constant 2 : index
    %30 = vector.load %arg1[%c0_11, %c2] : memref<32x16xf32, #tpu.memory_space<vmem>>, vector<32x1xf32>
    %cst_12 = arith.constant dense<0.000000e+00> : vector<32x128xf32>
    %31 = tpu.matmul %29, %28, %cst_12 {dimension_numbers = #tpu.dot_dimension_numbers<[1], [0], [0], [1], [0, 0, 1, 1], [], []>} : vector<32x16xf32>, vector<16x128xf32>, vector<32x128xf32> -> vector<32x128xf32>
    %32 = vector.broadcast %30 : vector<32x1xf32> to vector<32x128xf32>
    %33 = arith.addf %31, %32 : vector<32x128xf32>
    %c0_13 = arith.constant 0 : index
    %c3 = arith.constant 3 : index
    %34 = vector.load %arg1[%c0_13, %c3] : memref<32x16xf32, #tpu.memory_space<vmem>>, vector<32x1xf32>
    %c0_14 = arith.constant 0 : index
    %c4 = arith.constant 4 : index
    %35 = vector.load %arg1[%c0_14, %c4] : memref<32x16xf32, #tpu.memory_space<vmem>>, vector<32x1xf32>
    %cst_15 = arith.constant dense<0.000000e+00> : vector<32x1xf32>
    %36 = tpu.matmul %33, %4, %cst_15 {dimension_numbers = #tpu.dot_dimension_numbers<[1], [0], [0], [1], [0, 0, 1, 1], [], []>} : vector<32x128xf32>, vector<128x1xf32>, vector<32x1xf32> -> vector<32x1xf32>
    %37 = arith.mulf %33, %33 : vector<32x128xf32>
    %cst_16 = arith.constant dense<0.000000e+00> : vector<32x1xf32>
    %38 = tpu.matmul %37, %4, %cst_16 {dimension_numbers = #tpu.dot_dimension_numbers<[1], [0], [0], [1], [0, 0, 1, 1], [], []>} : vector<32x128xf32>, vector<128x1xf32>, vector<32x1xf32> -> vector<32x1xf32>
    %cst_17 = arith.constant 1.250000e-01 : f32
    %39 = vector.broadcast %cst_17 : f32 to vector<32x1xf32>
    %40 = arith.mulf %36, %39 : vector<32x1xf32>
    %cst_18 = arith.constant 1.250000e-01 : f32
    %41 = vector.broadcast %cst_18 : f32 to vector<32x1xf32>
    %42 = arith.mulf %38, %41 : vector<32x1xf32>
    %43 = arith.mulf %40, %40 : vector<32x1xf32>
    %44 = arith.subf %42, %43 : vector<32x1xf32>
    %cst_19 = arith.constant 9.99999974E-6 : f32
    %45 = vector.broadcast %cst_19 : f32 to vector<32x1xf32>
    %46 = arith.addf %44, %45 : vector<32x1xf32>
    %47 = math.rsqrt %46 : vector<32x1xf32>
    %48 = arith.mulf %34, %47 : vector<32x1xf32>
    %49 = arith.mulf %40, %48 : vector<32x1xf32>
    %50 = arith.subf %35, %49 : vector<32x1xf32>
    %51 = vector.broadcast %48 : vector<32x1xf32> to vector<32x128xf32>
    %52 = arith.mulf %33, %51 : vector<32x128xf32>
    %53 = vector.broadcast %50 : vector<32x1xf32> to vector<32x128xf32>
    %54 = arith.addf %52, %53 : vector<32x128xf32>
    %cst_20 = arith.constant 0.000000e+00 : f32
    %55 = vector.broadcast %cst_20 : f32 to vector<32x128xf32>
    %56 = arith.maximumf %54, %55 : vector<32x128xf32>
    %c32 = arith.constant 32 : index
    %c0_21 = arith.constant 0 : index
    %57 = vector.load %arg2[%c32, %c0_21] : memref<64x32xf32, #tpu.memory_space<vmem>>, vector<16x32xf32>
    %c0_22 = arith.constant 0 : index
    %c5 = arith.constant 5 : index
    %58 = vector.load %arg1[%c0_22, %c5] : memref<32x16xf32, #tpu.memory_space<vmem>>, vector<16x1xf32>
    %cst_23 = arith.constant dense<0.000000e+00> : vector<16x128xf32>
    %59 = tpu.matmul %57, %56, %cst_23 {dimension_numbers = #tpu.dot_dimension_numbers<[1], [0], [0], [1], [0, 0, 1, 1], [], []>} : vector<16x32xf32>, vector<32x128xf32>, vector<16x128xf32> -> vector<16x128xf32>
    %60 = vector.broadcast %58 : vector<16x1xf32> to vector<16x128xf32>
    %61 = arith.addf %59, %60 : vector<16x128xf32>
    %c0_24 = arith.constant 0 : index
    %c6 = arith.constant 6 : index
    %62 = vector.load %arg1[%c0_24, %c6] : memref<32x16xf32, #tpu.memory_space<vmem>>, vector<16x1xf32>
    %c0_25 = arith.constant 0 : index
    %c7 = arith.constant 7 : index
    %63 = vector.load %arg1[%c0_25, %c7] : memref<32x16xf32, #tpu.memory_space<vmem>>, vector<16x1xf32>
    %cst_26 = arith.constant dense<0.000000e+00> : vector<16x1xf32>
    %64 = tpu.matmul %61, %4, %cst_26 {dimension_numbers = #tpu.dot_dimension_numbers<[1], [0], [0], [1], [0, 0, 1, 1], [], []>} : vector<16x128xf32>, vector<128x1xf32>, vector<16x1xf32> -> vector<16x1xf32>
    %65 = arith.mulf %61, %61 : vector<16x128xf32>
    %cst_27 = arith.constant dense<0.000000e+00> : vector<16x1xf32>
    %66 = tpu.matmul %65, %4, %cst_27 {dimension_numbers = #tpu.dot_dimension_numbers<[1], [0], [0], [1], [0, 0, 1, 1], [], []>} : vector<16x128xf32>, vector<128x1xf32>, vector<16x1xf32> -> vector<16x1xf32>
    %cst_28 = arith.constant 1.250000e-01 : f32
    %67 = vector.broadcast %cst_28 : f32 to vector<16x1xf32>
    %68 = arith.mulf %64, %67 : vector<16x1xf32>
    %cst_29 = arith.constant 1.250000e-01 : f32
    %69 = vector.broadcast %cst_29 : f32 to vector<16x1xf32>
    %70 = arith.mulf %66, %69 : vector<16x1xf32>
    %71 = arith.mulf %68, %68 : vector<16x1xf32>
    %72 = arith.subf %70, %71 : vector<16x1xf32>
    %cst_30 = arith.constant 9.99999974E-6 : f32
    %73 = vector.broadcast %cst_30 : f32 to vector<16x1xf32>
    %74 = arith.addf %72, %73 : vector<16x1xf32>
    %75 = math.rsqrt %74 : vector<16x1xf32>
    %76 = arith.mulf %62, %75 : vector<16x1xf32>
    %77 = arith.mulf %68, %76 : vector<16x1xf32>
    %78 = arith.subf %63, %77 : vector<16x1xf32>
    %79 = vector.broadcast %76 : vector<16x1xf32> to vector<16x128xf32>
    %80 = arith.mulf %61, %79 : vector<16x128xf32>
    %81 = vector.broadcast %78 : vector<16x1xf32> to vector<16x128xf32>
    %82 = arith.addf %80, %81 : vector<16x128xf32>
    %cst_31 = arith.constant 0.000000e+00 : f32
    %83 = vector.broadcast %cst_31 : f32 to vector<16x128xf32>
    %84 = arith.maximumf %82, %83 : vector<16x128xf32>
    %c48 = arith.constant 48 : index
    %c0_32 = arith.constant 0 : index
    %85 = vector.load %arg2[%c48, %c0_32] : memref<64x32xf32, #tpu.memory_space<vmem>>, vector<8x16xf32>
    %c0_33 = arith.constant 0 : index
    %c8 = arith.constant 8 : index
    %86 = vector.load %arg1[%c0_33, %c8] : memref<32x16xf32, #tpu.memory_space<vmem>>, vector<8x1xf32>
    %cst_34 = arith.constant dense<0.000000e+00> : vector<8x128xf32>
    %87 = tpu.matmul %85, %84, %cst_34 {dimension_numbers = #tpu.dot_dimension_numbers<[1], [0], [0], [1], [0, 0, 1, 1], [], []>} : vector<8x16xf32>, vector<16x128xf32>, vector<8x128xf32> -> vector<8x128xf32>
    %88 = vector.broadcast %86 : vector<8x1xf32> to vector<8x128xf32>
    %89 = arith.addf %87, %88 : vector<8x128xf32>
    %c0_35 = arith.constant 0 : index
    %c9 = arith.constant 9 : index
    %90 = vector.load %arg1[%c0_35, %c9] : memref<32x16xf32, #tpu.memory_space<vmem>>, vector<8x1xf32>
    %c0_36 = arith.constant 0 : index
    %c10 = arith.constant 10 : index
    %91 = vector.load %arg1[%c0_36, %c10] : memref<32x16xf32, #tpu.memory_space<vmem>>, vector<8x1xf32>
    %cst_37 = arith.constant dense<0.000000e+00> : vector<8x1xf32>
    %92 = tpu.matmul %89, %4, %cst_37 {dimension_numbers = #tpu.dot_dimension_numbers<[1], [0], [0], [1], [0, 0, 1, 1], [], []>} : vector<8x128xf32>, vector<128x1xf32>, vector<8x1xf32> -> vector<8x1xf32>
    %93 = arith.mulf %89, %89 : vector<8x128xf32>
    %cst_38 = arith.constant dense<0.000000e+00> : vector<8x1xf32>
    %94 = tpu.matmul %93, %4, %cst_38 {dimension_numbers = #tpu.dot_dimension_numbers<[1], [0], [0], [1], [0, 0, 1, 1], [], []>} : vector<8x128xf32>, vector<128x1xf32>, vector<8x1xf32> -> vector<8x1xf32>
    %cst_39 = arith.constant 1.250000e-01 : f32
    %95 = vector.broadcast %cst_39 : f32 to vector<8x1xf32>
    %96 = arith.mulf %92, %95 : vector<8x1xf32>
    %cst_40 = arith.constant 1.250000e-01 : f32
    %97 = vector.broadcast %cst_40 : f32 to vector<8x1xf32>
    %98 = arith.mulf %94, %97 : vector<8x1xf32>
    %99 = arith.mulf %96, %96 : vector<8x1xf32>
    %100 = arith.subf %98, %99 : vector<8x1xf32>
    %cst_41 = arith.constant 9.99999974E-6 : f32
    %101 = vector.broadcast %cst_41 : f32 to vector<8x1xf32>
    %102 = arith.addf %100, %101 : vector<8x1xf32>
    %103 = math.rsqrt %102 : vector<8x1xf32>
    %104 = arith.mulf %90, %103 : vector<8x1xf32>
    %105 = arith.mulf %96, %104 : vector<8x1xf32>
    %106 = arith.subf %91, %105 : vector<8x1xf32>
    %107 = vector.broadcast %104 : vector<8x1xf32> to vector<8x128xf32>
    %108 = arith.mulf %89, %107 : vector<8x128xf32>
    %109 = vector.broadcast %106 : vector<8x1xf32> to vector<8x128xf32>
    %110 = arith.addf %108, %109 : vector<8x128xf32>
    %cst_42 = arith.constant 0.000000e+00 : f32
    %111 = vector.broadcast %cst_42 : f32 to vector<8x128xf32>
    %112 = arith.maximumf %110, %111 : vector<8x128xf32>
    %c56 = arith.constant 56 : index
    %c0_43 = arith.constant 0 : index
    %113 = vector.load %arg2[%c56, %c0_43] : memref<64x32xf32, #tpu.memory_space<vmem>>, vector<8x8xf32>
    %c0_44 = arith.constant 0 : index
    %c11 = arith.constant 11 : index
    %114 = vector.load %arg1[%c0_44, %c11] : memref<32x16xf32, #tpu.memory_space<vmem>>, vector<8x1xf32>
    %cst_45 = arith.constant dense<0.000000e+00> : vector<8x128xf32>
    %115 = tpu.matmul %113, %112, %cst_45 {dimension_numbers = #tpu.dot_dimension_numbers<[1], [0], [0], [1], [0, 0, 1, 1], [], []>} : vector<8x8xf32>, vector<8x128xf32>, vector<8x128xf32> -> vector<8x128xf32>
    %116 = vector.broadcast %114 : vector<8x1xf32> to vector<8x128xf32>
    %117 = arith.addf %115, %116 : vector<8x128xf32>
    %c0_46 = arith.constant 0 : index
    %c12 = arith.constant 12 : index
    %118 = vector.load %arg1[%c0_46, %c12] : memref<32x16xf32, #tpu.memory_space<vmem>>, vector<8x1xf32>
    %c0_47 = arith.constant 0 : index
    %c13 = arith.constant 13 : index
    %119 = vector.load %arg1[%c0_47, %c13] : memref<32x16xf32, #tpu.memory_space<vmem>>, vector<8x1xf32>
    %cst_48 = arith.constant dense<0.000000e+00> : vector<8x1xf32>
    %120 = tpu.matmul %117, %4, %cst_48 {dimension_numbers = #tpu.dot_dimension_numbers<[1], [0], [0], [1], [0, 0, 1, 1], [], []>} : vector<8x128xf32>, vector<128x1xf32>, vector<8x1xf32> -> vector<8x1xf32>
    %121 = arith.mulf %117, %117 : vector<8x128xf32>
    %cst_49 = arith.constant dense<0.000000e+00> : vector<8x1xf32>
    %122 = tpu.matmul %121, %4, %cst_49 {dimension_numbers = #tpu.dot_dimension_numbers<[1], [0], [0], [1], [0, 0, 1, 1], [], []>} : vector<8x128xf32>, vector<128x1xf32>, vector<8x1xf32> -> vector<8x1xf32>
    %cst_50 = arith.constant 1.250000e-01 : f32
    %123 = vector.broadcast %cst_50 : f32 to vector<8x1xf32>
    %124 = arith.mulf %120, %123 : vector<8x1xf32>
    %cst_51 = arith.constant 1.250000e-01 : f32
    %125 = vector.broadcast %cst_51 : f32 to vector<8x1xf32>
    %126 = arith.mulf %122, %125 : vector<8x1xf32>
    %127 = arith.mulf %124, %124 : vector<8x1xf32>
    %128 = arith.subf %126, %127 : vector<8x1xf32>
    %cst_52 = arith.constant 9.99999974E-6 : f32
    %129 = vector.broadcast %cst_52 : f32 to vector<8x1xf32>
    %130 = arith.addf %128, %129 : vector<8x1xf32>
    %131 = math.rsqrt %130 : vector<8x1xf32>
    %132 = arith.mulf %118, %131 : vector<8x1xf32>
    %133 = arith.mulf %124, %132 : vector<8x1xf32>
    %134 = arith.subf %119, %133 : vector<8x1xf32>
    %135 = vector.broadcast %132 : vector<8x1xf32> to vector<8x128xf32>
    %136 = arith.mulf %117, %135 : vector<8x128xf32>
    %137 = vector.broadcast %134 : vector<8x1xf32> to vector<8x128xf32>
    %138 = arith.addf %136, %137 : vector<8x128xf32>
    %cst_53 = arith.constant 0.000000e+00 : f32
    %139 = vector.broadcast %cst_53 : f32 to vector<8x128xf32>
    %140 = arith.maximumf %138, %139 : vector<8x128xf32>
    %c0_54 = arith.constant 0 : index
    %c0_55 = arith.constant 0 : index
    %141 = vector.load %arg3[%c0_54, %c0_55] : memref<8x128xf32, #tpu.memory_space<vmem>>, vector<8x128xf32>
    tpu.vector_store %arg3[%c0_54, %c0_55], %140 {strides = array<i32>} : memref<8x128xf32, #tpu.memory_space<vmem>>, vector<8x128xf32>,
    return
  }
}

</mosaic_0001>

<llo_original>
// kernel: test_forward.1
$region0: #{test_forward.1}
  #allocation0 [shape = 'u32[]', space=smem, size = 0x4, offset = 0x4, fixed_abs, tag = 'smem constant byte address 0x4 - core index']
  #allocation1 [shape = 'u32[144,128]{1,0:T(1,128)}', space=vmem, size = 0x12000, scoped, tag = 'internal scratch']
  %s0 = inlined_call_operand.vmem [shape: f32[16,128], index: 0, kind: input, shape index: {}]
  %s1 = inlined_call_operand.vmem [shape: f32[32,16], index: 1, kind: input, shape index: {}]
  %s2 = inlined_call_operand.vmem [shape: f32[64,32], index: 2, kind: input, shape index: {}]
  %s3 = inlined_call_operand.vmem [shape: f32[8,128], index: 3, kind: output, shape index: {}]
  %s4 = sld [smem:[#allocation0]]
  $region22: #{test_forward.1} parent=0
    _
  %s6 = ssub.s32 1, %s4
  %s7 = scalar_select 0, %s6, %s4
  // Predicated region
  $region2: #{test_forward.1} parent=0 // pred_check
    _
  $region3: #{test_forward.1} parent=0 // pred_check_branch
    %9 = sbr.rel (0) target = $region5
  $region4: #{test_forward.1} parent=0 // pred_region
    _
  $region5: #{test_forward.1} parent=0 // pred_fallthru
    _
  // Predicated region
  $region6: #{test_forward.1} parent=0 // pred_check
    _
  $region7: #{test_forward.1} parent=0 // pred_check_branch
    %11 = sbr.rel (0) target = $region9
  $region8: #{test_forward.1} parent=0 // pred_region
    _
  $region9: #{test_forward.1} parent=0 // pred_fallthru
    _
  // Predicated region
  $region10: #{test_forward.1} parent=0 // pred_check
    _
  $region11: #{test_forward.1} parent=0 // pred_check_branch
    %13 = sbr.rel (0) target = $region13
  $region12: #{test_forward.1} parent=0 // pred_region
    _
  $region13: #{test_forward.1} parent=0 // pred_fallthru
    _
  %v14 = vlaneseq
  %v15 = vshrl.u32 %v14, 7
  %v16 = vadd.s32 %v15, 8
  %v17 = vadd.s32 %v15, 16
  %v18 = vadd.s32 %v15, 24
  %v19 = vadd.s32 %v15, 32
  %v20 = vadd.s32 %v15, 40
  %v21 = vadd.s32 %v15, 48
  %v22 = vadd.s32 %v15, 56
  %v23 = vadd.s32 %v15, 64
  %v24 = vadd.s32 %v15, 72
  %v25 = vadd.s32 %v15, 80
  %v26 = vadd.s32 %v15, 88
  %v27 = vadd.s32 %v15, 96
  %v28 = vadd.s32 %v15, 104
  %v29 = vadd.s32 %v15, 112
  %v30 = vadd.s32 %v15, 120
  %vm31 = vcmp.lt.s32.totalorder %v15, 8
  %vm32 = vcmp.lt.s32.totalorder %v16, 8
  %vm33 = vcmp.lt.s32.totalorder %v17, 8
  %vm34 = vcmp.lt.s32.totalorder %v18, 8
  %vm35 = vcmp.lt.s32.totalorder %v19, 8
  %vm36 = vcmp.lt.s32.totalorder %v20, 8
  %vm37 = vcmp.lt.s32.totalorder %v21, 8
  %vm38 = vcmp.lt.s32.totalorder %v22, 8
  %vm39 = vcmp.lt.s32.totalorder %v23, 8
  %vm40 = vcmp.lt.s32.totalorder %v24, 8
  %vm41 = vcmp.lt.s32.totalorder %v25, 8
  %vm42 = vcmp.lt.s32.totalorder %v26, 8
  %vm43 = vcmp.lt.s32.totalorder %v27, 8
  %vm44 = vcmp.lt.s32.totalorder %v28, 8
  %vm45 = vcmp.lt.s32.totalorder %v29, 8
  %vm46 = vcmp.lt.s32.totalorder %v30, 8
  %v47 = vsel %vm31, 1, 0
  %v48 = vsel %vm32, 1, 0
  %v49 = vsel %vm33, 1, 0
  %v50 = vsel %vm34, 1, 0
  %v51 = vsel %vm35, 1, 0
  %v52 = vsel %vm36, 1, 0
  %v53 = vsel %vm37, 1, 0
  %v54 = vsel %vm38, 1, 0
  %v55 = vsel %vm39, 1, 0
  %v56 = vsel %vm40, 1, 0
  %v57 = vsel %vm41, 1, 0
  %v58 = vsel %vm42, 1, 0
  %v59 = vsel %vm43, 1, 0
  %v60 = vsel %vm44, 1, 0
  %v61 = vsel %vm45, 1, 0
  %v62 = vsel %vm46, 1, 0
  %v63 = vcvt.s32.f32 %v47
  %v64 = vcvt.s32.f32 %v48
  %v65 = vcvt.s32.f32 %v49
  %v66 = vcvt.s32.f32 %v50
  %v67 = vcvt.s32.f32 %v51
  %v68 = vcvt.s32.f32 %v52
  %v69 = vcvt.s32.f32 %v53
  %v70 = vcvt.s32.f32 %v54
  %v71 = vcvt.s32.f32 %v55
  %v72 = vcvt.s32.f32 %v56
  %v73 = vcvt.s32.f32 %v57
  %v74 = vcvt.s32.f32 %v58
  %v75 = vcvt.s32.f32 %v59
  %v76 = vcvt.s32.f32 %v60
  %v77 = vcvt.s32.f32 %v61
  %v78 = vcvt.s32.f32 %v62
  %v79 = vld [vmem:[%s0] sm:$0xff]
  %v80 = vld [vmem:[%s0 + $0x8] sm:$0xff]
  %v81 = vld [vmem:[%s1] sm:$0xff]
  %v82 = vld [vmem:[%s1 + $0x8] sm:$0xff]
  %83 = vmatprep.subr.mxu0 0.0
  %84 = vmatpush1.msra.mxu0 %v63
  %85 = vmatprep.subr.mxu0 0.0
  %86 = vmatpush1.msra.mxu0 %v64
  %87 = vmatprep.subr.mxu0 0.0
  %88 = vmatpush1.msra.mxu0 %v65
  %89 = vmatprep.subr.mxu0 0.0
  %90 = vmatpush1.msra.mxu0 %v66
  %91 = vmatprep.subr.mxu0 0.0
  %92 = vmatpush1.msra.mxu0 %v67
  %93 = vmatprep.subr.mxu0 0.0
  %94 = vmatpush1.msra.mxu0 %v68
  %95 = vmatprep.subr.mxu0 0.0
  %96 = vmatpush1.msra.mxu0 %v69
  %97 = vmatprep.subr.mxu0 0.0
  %98 = vmatpush1.msra.mxu0 %v70
  %99 = vmatprep.subr.mxu0 0.0
  %100 = vmatpush1.msra.mxu0 %v71
  %101 = vmatprep.subr.mxu0 0.0
  %102 = vmatpush1.msra.mxu0 %v72
  %103 = vmatprep.subr.mxu0 0.0
  %104 = vmatpush1.msra.mxu0 %v73
  %105 = vmatprep.subr.mxu0 0.0
  %106 = vmatpush1.msra.mxu0 %v74
  %107 = vmatprep.subr.mxu0 0.0
  %108 = vmatpush1.msra.mxu0 %v75
  %109 = vmatprep.subr.mxu0 0.0
  %110 = vmatpush1.msra.mxu0 %v76
  %111 = vmatprep.subr.mxu0 0.0
  %112 = vmatpush1.msra.mxu0 %v77
  %113 = vmatprep.subr.mxu0 0.0
  %114 = vmatpush1.msra.mxu0 %v78
  %115 = vmatprep.subr.mxu0 0.0
  %116 = vmatpush1.msra.mxu0 0.0
  %117 = vmatprep.subr.mxu0 0.0
  %118 = vmatpush1.msra.mxu0 0.0
  %119 = vmatprep.subr.mxu0 0.0
  %120 = vmatpush1.msra.mxu0 0.0
  %121 = vmatprep.subr.mxu0 0.0
  %122 = vmatpush1.msra.mxu0 0.0
  %123 = vmatprep.subr.mxu0 0.0
  %124 = vmatpush1.msra.mxu0 0.0
  %125 = vmatprep.subr.mxu0 0.0
  %126 = vmatpush1.msra.mxu0 0.0
  %127 = vmatprep.subr.mxu0 0.0
  %128 = vmatpush1.msra.mxu0 0.0
  %129 = vmatprep.subr.mxu0 0.0
  %130 = vmatpush1.msra.mxu0 0.0
  %131 = vmatprep.subr.mxu0 0.0
  %132 = vmatpush1.msra.mxu0 0.0
  %133 = vmatprep.subr.mxu0 0.0
  %134 = vmatpush1.msra.mxu0 0.0
  %135 = vmatprep.subr.mxu0 0.0
  %136 = vmatpush1.msra.mxu0 0.0
  %137 = vmatprep.subr.mxu0 0.0
  %138 = vmatpush1.msra.mxu0 0.0
  %139 = vmatprep.subr.mxu0 0.0
  %140 = vmatpush1.msra.mxu0 0.0
  %141 = vmatprep.subr.mxu0 0.0
  %142 = vmatpush1.msra.mxu0 0.0
  %143 = vmatprep.subr.mxu0 0.0
  %144 = vmatpush1.msra.mxu0 0.0
  %145 = vmatprep.subr.mxu0 0.0
  %146 = vmatpush1.msra.mxu0 0.0
  %147 = vmatprep.mubr.f32.mxu0 0.0
  %148 = vmatmul.mubr.f32.gmra.mrb[0].mxu0 %v79
  %v149 = vpop.f32.mrb[0].mxu0
  %v150 = vadd.f32 0.0, %v149
  %v151 = vpop.f32.mrb[0].mxu0
  %152 = vmatprep.mubr.f32.mxu0 0.0
  %153 = vmatmul.mubr.f32.gmra.mrb[0].mxu0 %v80
  %v154 = vpop.f32.mrb[0].mxu0
  %v155 = vadd.f32 0.0, %v154
  %v156 = vpop.f32.mrb[0].mxu0
  %157 = vdwg.mxu0
  %v158 = vmul.f32 %v79, %v79
  %v159 = vmul.f32 %v80, %v80
  %160 = vmatprep.subr.mxu0 0.0
  %161 = vmatpush1.msra.mxu0 %v63
  %162 = vmatprep.subr.mxu0 0.0
  %163 = vmatpush1.msra.mxu0 %v64
  %164 = vmatprep.subr.mxu0 0.0
  %165 = vmatpush1.msra.mxu0 %v65
  %166 = vmatprep.subr.mxu0 0.0
  %167 = vmatpush1.msra.mxu0 %v66
  %168 = vmatprep.subr.mxu0 0.0
  %169 = vmatpush1.msra.mxu0 %v67
  %170 = vmatprep.subr.mxu0 0.0
  %171 = vmatpush1.msra.mxu0 %v68
  %172 = vmatprep.subr.mxu0 0.0
  %173 = vmatpush1.msra.mxu0 %v69
  %174 = vmatprep.subr.mxu0 0.0
  %175 = vmatpush1.msra.mxu0 %v70
  %176 = vmatprep.subr.mxu0 0.0
  %177 = vmatpush1.msra.mxu0 %v71
  %178 = vmatprep.subr.mxu0 0.0
  %179 = vmatpush1.msra.mxu0 %v72
  %180 = vmatprep.subr.mxu0 0.0
  %181 = vmatpush1.msra.mxu0 %v73
  %182 = vmatprep.subr.mxu0 0.0
  %183 = vmatpush1.msra.mxu0 %v74
  %184 = vmatprep.subr.mxu0 0.0
  %185 = vmatpush1.msra.mxu0 %v75
  %186 = vmatprep.subr.mxu0 0.0
  %187 = vmatpush1.msra.mxu0 %v76
  %188 = vmatprep.subr.mxu0 0.0
  %189 = vmatpush1.msra.mxu0 %v77
  %190 = vmatprep.subr.mxu0 0.0
  %191 = vmatpush1.msra.mxu0 %v78
  %192 = vmatprep.subr.mxu0 0.0
  %193 = vmatpush1.msra.mxu0 0.0
  %194 = vmatprep.subr.mxu0 0.0
  %195 = vmatpush1.msra.mxu0 0.0
  %196 = vmatprep.subr.mxu0 0.0
  %197 = vmatpush1.msra.mxu0 0.0
  %198 = vmatprep.subr.mxu0 0.0
  %199 = vmatpush1.msra.mxu0 0.0
  %200 = vmatprep.subr.mxu0 0.0
  %201 = vmatpush1.msra.mxu0 0.0
  %202 = vmatprep.subr.mxu0 0.0
  %203 = vmatpush1.msra.mxu0 0.0
  %204 = vmatprep.subr.mxu0 0.0
  %205 = vmatpush1.msra.mxu0 0.0
  %206 = vmatprep.subr.mxu0 0.0
  %207 = vmatpush1.msra.mxu0 0.0
  %208 = vmatprep.subr.mxu0 0.0
  %209 = vmatpush1.msra.mxu0 0.0
  %210 = vmatprep.subr.mxu0 0.0
  %211 = vmatpush1.msra.mxu0 0.0
  %212 = vmatprep.subr.mxu0 0.0
  %213 = vmatpush1.msra.mxu0 0.0
  %214 = vmatprep.subr.mxu0 0.0
  %215 = vmatpush1.msra.mxu0 0.0
  %216 = vmatprep.subr.mxu0 0.0
  %217 = vmatpush1.msra.mxu0 0.0
  %218 = vmatprep.subr.mxu0 0.0
  %219 = vmatpush1.msra.mxu0 0.0
  %220 = vmatprep.subr.mxu0 0.0
  %221 = vmatpush1.msra.mxu0 0.0
  %222 = vmatprep.subr.mxu0 0.0
  %223 = vmatpush1.msra.mxu0 0.0
  %224 = vmatprep.mubr.f32.mxu0 0.0
  %225 = vmatmul.mubr.f32.gmra.mrb[0].mxu0 %v158
  %v226 = vpop.f32.mrb[0].mxu0
  %v227 = vadd.f32 0.0, %v226
  %v228 = vpop.f32.mrb[0].mxu0
  %229 = vmatprep.mubr.f32.mxu0 0.0
  %230 = vmatmul.mubr.f32.gmra.mrb[0].mxu0 %v159
  %v231 = vpop.f32.mrb[0].mxu0
  %v232 = vadd.f32 0.0, %v231
  %v233 = vpop.f32.mrb[0].mxu0
  %234 = vdwg.mxu0
  %v235 = vmul.f32 %v150, 0.125
  %v236 = vmul.f32 %v155, 0.125
  %v237 = vmul.f32 %v227, 0.125
  %v238 = vmul.f32 %v232, 0.125
  %v239 = vmul.f32 %v235, %v235
  %v240 = vmul.f32 %v236, %v236
  %v241 = vsub.f32 %v237, %v239
  %v242 = vsub.f32 %v238, %v240
  %v243 = vadd.f32 %v241, 1e-05
  %v244 = vadd.f32 %v242, 1e-05
  %v245 = vrsqrt.pop %v243
  %v246 = vrsqrt.pop %v244
  %v247 = vmul.f32 %v81, %v245
  %v248 = vmul.f32 %v82, %v246
  %v249 = vmul.f32 %v235, %v247
  %v250 = vmul.f32 %v236, %v248
  %253 = vrot.lane.b32.xlu0 %v249, 1
  %v254 = vpop.permute.xlu0 %253
  %255 = vrot.lane.b32.xlu0 %v250, 1
  %v256 = vpop.permute.xlu0 %255
  %v259 = vsub.f32 %v81, %v254
  %v260 = vsub.f32 %v82, %v256
  %262 = vset.pattern.permute.xlu0 0
  %263 = vperm.xlu0 %262, %v247
  %v264 = vpop.permute.xlu0 %263
  %267 = vset.pattern.permute.xlu0 0
  %268 = vperm.xlu0 %267, %v248
  %v269 = vpop.permute.xlu0 %268
  %v271 = vmul.f32 %v79, %v264
  %v272 = vmul.f32 %v80, %v269
  %274 = vset.pattern.permute.xlu0 1
  %275 = vperm.xlu0 %274, %v259
  %v276 = vpop.permute.xlu0 %275
  %279 = vset.pattern.permute.xlu0 1
  %280 = vperm.xlu0 %279, %v260
  %v281 = vpop.permute.xlu0 %280
  %v283 = vadd.f32 %v271, %v276
  %v284 = vadd.f32 %v272, %v281
  %v285 = vmax.f32 %v283, 0.0
  %v286 = vmax.f32 %v284, 0.0
  %v287 = vld [vmem:[%s2] sm:$0xff]
  %v288 = vld [vmem:[%s2 + $0x8] sm:$0xff]
  %v289 = vld [vmem:[%s2 + $0x10] sm:$0xff]
  %v290 = vld [vmem:[%s2 + $0x18] sm:$0xff]
  %v291 = vld [vmem:[%s1] sm:$0xff]
  %v292 = vld [vmem:[%s1 + $0x8] sm:$0xff]
  %v293 = vld [vmem:[%s1 + $0x10] sm:$0xff]
  %v294 = vld [vmem:[%s1 + $0x18] sm:$0xff]
  %296 = vset.pattern.permute.xlu0 2
  %297 = vperm.xlu0 %296, %v291
  %v298 = vpop.permute.xlu0 %297
  %301 = vset.pattern.permute.xlu0 2
  %302 = vperm.xlu0 %301, %v292
  %v303 = vpop.permute.xlu0 %302
  %306 = vset.pattern.permute.xlu0 2
  %307 = vperm.xlu0 %306, %v293
  %v308 = vpop.permute.xlu0 %307
  %311 = vset.pattern.permute.xlu0 2
  %312 = vperm.xlu0 %311, %v294
  %v313 = vpop.permute.xlu0 %312
  %vm315 = vcmask 130048
  %v317 = vsel %vm315, %v287, 0
  %v320 = vsel %vm315, %v288, 0
  %v323 = vsel %vm315, %v289, 0
  %v326 = vsel %vm315, %v290, 0
  %328 = vmatprep.subr.mxu0 0.0
  %329 = vmatpush1.msra.mxu0 %v285
  %330 = vmatprep.subr.mxu0 0.0
  %331 = vmatpush1.msra.mxu0 %v286
  %332 = vmatprep.subr.mxu0 0.0
  %333 = vmatpush1.msra.mxu0 0.0
  %334 = vmatprep.subr.mxu0 0.0
  %335 = vmatpush1.msra.mxu0 0.0
  %336 = vmatprep.subr.mxu0 0.0
  %337 = vmatpush1.msra.mxu0 0.0
  %338 = vmatprep.subr.mxu0 0.0
  %339 = vmatpush1.msra.mxu0 0.0
  %340 = vmatprep.subr.mxu0 0.0
  %341 = vmatpush1.msra.mxu0 0.0
  %342 = vmatprep.subr.mxu0 0.0
  %343 = vmatpush1.msra.mxu0 0.0
  %344 = vmatprep.subr.mxu0 0.0
  %345 = vmatpush1.msra.mxu0 0.0
  %346 = vmatprep.subr.mxu0 0.0
  %347 = vmatpush1.msra.mxu0 0.0
  %348 = vmatprep.subr.mxu0 0.0
  %349 = vmatpush1.msra.mxu0 0.0
  %350 = vmatprep.subr.mxu0 0.0
  %351 = vmatpush1.msra.mxu0 0.0
  %352 = vmatprep.subr.mxu0 0.0
  %353 = vmatpush1.msra.mxu0 0.0
  %354 = vmatprep.subr.mxu0 0.0
  %355 = vmatpush1.msra.mxu0 0.0
  %356 = vmatprep.subr.mxu0 0.0
  %357 = vmatpush1.msra.mxu0 0.0
  %358 = vmatprep.subr.mxu0 0.0
  %359 = vmatpush1.msra.mxu0 0.0
  %360 = vmatprep.subr.mxu0 0.0
  %361 = vmatpush1.msra.mxu0 0.0
  %362 = vmatprep.subr.mxu0 0.0
  %363 = vmatpush1.msra.mxu0 0.0
  %364 = vmatprep.subr.mxu0 0.0
  %365 = vmatpush1.msra.mxu0 0.0
  %366 = vmatprep.subr.mxu0 0.0
  %367 = vmatpush1.msra.mxu0 0.0
  %368 = vmatprep.subr.mxu0 0.0
  %369 = vmatpush1.msra.mxu0 0.0
  %370 = vmatprep.subr.mxu0 0.0
  %371 = vmatpush1.msra.mxu0 0.0
  %372 = vmatprep.subr.mxu0 0.0
  %373 = vmatpush1.msra.mxu0 0.0
  %374 = vmatprep.subr.mxu0 0.0
  %375 = vmatpush1.msra.mxu0 0.0
  %376 = vmatprep.subr.mxu0 0.0
  %377 = vmatpush1.msra.mxu0 0.0
  %378 = vmatprep.subr.mxu0 0.0
  %379 = vmatpush1.msra.mxu0 0.0
  %380 = vmatprep.subr.mxu0 0.0
  %381 = vmatpush1.msra.mxu0 0.0
  %382 = vmatprep.subr.mxu0 0.0
  %383 = vmatpush1.msra.mxu0 0.0
  %384 = vmatprep.subr.mxu0 0.0
  %385 = vmatpush1.msra.mxu0 0.0
  %386 = vmatprep.subr.mxu0 0.0
  %387 = vmatpush1.msra.mxu0 0.0
  %388 = vmatprep.subr.mxu0 0.0
  %389 = vmatpush1.msra.mxu0 0.0
  %390 = vmatprep.subr.mxu0 0.0
  %391 = vmatpush1.msra.mxu0 0.0
  %392 = vmatprep.mubr.f32.mxu0 0.0
  %393 = vmatmul.mubr.f32.gmra.mrb[0].mxu0 %v317
  %v394 = vpop.f32.mrb[0].mxu0
  %v395 = vadd.f32 %v298, %v394
  %v396 = vpop.f32.mrb[0].mxu0
  %397 = vmatprep.mubr.f32.mxu0 0.0
  %398 = vmatmul.mubr.f32.gmra.mrb[0].mxu0 %v320
  %v399 = vpop.f32.mrb[0].mxu0
  %v400 = vadd.f32 %v303, %v399
  %v401 = vpop.f32.mrb[0].mxu0
  %402 = vmatprep.mubr.f32.mxu0 0.0
  %403 = vmatmul.mubr.f32.gmra.mrb[0].mxu0 %v323
  %v404 = vpop.f32.mrb[0].mxu0
  %v405 = vadd.f32 %v308, %v404
  %v406 = vpop.f32.mrb[0].mxu0
  %407 = vmatprep.mubr.f32.mxu0 0.0
  %408 = vmatmul.mubr.f32.gmra.mrb[0].mxu0 %v326
  %v409 = vpop.f32.mrb[0].mxu0
  %v410 = vadd.f32 %v313, %v409
  %v411 = vpop.f32.mrb[0].mxu0
  %412 = vdwg.mxu0
  %413 = vmatprep.subr.mxu0 0.0
  %414 = vmatpush1.msra.mxu0 %v63
  %415 = vmatprep.subr.mxu0 0.0
  %416 = vmatpush1.msra.mxu0 %v64
  %417 = vmatprep.subr.mxu0 0.0
  %418 = vmatpush1.msra.mxu0 %v65
  %419 = vmatprep.subr.mxu0 0.0
  %420 = vmatpush1.msra.mxu0 %v66
  %421 = vmatprep.subr.mxu0 0.0
  %422 = vmatpush1.msra.mxu0 %v67
  %423 = vmatprep.subr.mxu0 0.0
  %424 = vmatpush1.msra.mxu0 %v68
  %425 = vmatprep.subr.mxu0 0.0
  %426 = vmatpush1.msra.mxu0 %v69
  %427 = vmatprep.subr.mxu0 0.0
  %428 = vmatpush1.msra.mxu0 %v70
  %429 = vmatprep.subr.mxu0 0.0
  %430 = vmatpush1.msra.mxu0 %v71
  %431 = vmatprep.subr.mxu0 0.0
  %432 = vmatpush1.msra.mxu0 %v72
  %433 = vmatprep.subr.mxu0 0.0
  %434 = vmatpush1.msra.mxu0 %v73
  %435 = vmatprep.subr.mxu0 0.0
  %436 = vmatpush1.msra.mxu0 %v74
  %437 = vmatprep.subr.mxu0 0.0
  %438 = vmatpush1.msra.mxu0 %v75
  %439 = vmatprep.subr.mxu0 0.0
  %440 = vmatpush1.msra.mxu0 %v76
  %441 = vmatprep.subr.mxu0 0.0
  %442 = vmatpush1.msra.mxu0 %v77
  %443 = vmatprep.subr.mxu0 0.0
  %444 = vmatpush1.msra.mxu0 %v78
  %445 = vmatprep.subr.mxu0 0.0
  %446 = vmatpush1.msra.mxu0 0.0
  %447 = vmatprep.subr.mxu0 0.0
  %448 = vmatpush1.msra.mxu0 0.0
  %449 = vmatprep.subr.mxu0 0.0
  %450 = vmatpush1.msra.mxu0 0.0
  %451 = vmatprep.subr.mxu0 0.0
  %452 = vmatpush1.msra.mxu0 0.0
  %453 = vmatprep.subr.mxu0 0.0
  %454 = vmatpush1.msra.mxu0 0.0
  %455 = vmatprep.subr.mxu0 0.0
  %456 = vmatpush1.msra.mxu0 0.0
  %457 = vmatprep.subr.mxu0 0.0
  %458 = vmatpush1.msra.mxu0 0.0
  %459 = vmatprep.subr.mxu0 0.0
  %460 = vmatpush1.msra.mxu0 0.0
  %461 = vmatprep.subr.mxu0 0.0
  %462 = vmatpush1.msra.mxu0 0.0
  %463 = vmatprep.subr.mxu0 0.0
  %464 = vmatpush1.msra.mxu0 0.0
  %465 = vmatprep.subr.mxu0 0.0
  %466 = vmatpush1.msra.mxu0 0.0
  %467 = vmatprep.subr.mxu0 0.0
  %468 = vmatpush1.msra.mxu0 0.0
  %469 = vmatprep.subr.mxu0 0.0
  %470 = vmatpush1.msra.mxu0 0.0
  %471 = vmatprep.subr.mxu0 0.0
  %472 = vmatpush1.msra.mxu0 0.0
  %473 = vmatprep.subr.mxu0 0.0
  %474 = vmatpush1.msra.mxu0 0.0
  %475 = vmatprep.subr.mxu0 0.0
  %476 = vmatpush1.msra.mxu0 0.0
  %477 = vmatprep.mubr.f32.mxu0 0.0
  %478 = vmatmul.mubr.f32.gmra.mrb[0].mxu0 %v395
  %v479 = vpop.f32.mrb[0].mxu0
  %v480 = vadd.f32 0.0, %v479
  %v481 = vpop.f32.mrb[0].mxu0
  %482 = vmatprep.mubr.f32.mxu0 0.0
  %483 = vmatmul.mubr.f32.gmra.mrb[0].mxu0 %v400
  %v484 = vpop.f32.mrb[0].mxu0
  %v485 = vadd.f32 0.0, %v484
  %v486 = vpop.f32.mrb[0].mxu0
  %487 = vmatprep.mubr.f32.mxu0 0.0
  %488 = vmatmul.mubr.f32.gmra.mrb[0].mxu0 %v405
  %v489 = vpop.f32.mrb[0].mxu0
  %v490 = vadd.f32 0.0, %v489
  %v491 = vpop.f32.mrb[0].mxu0
  %492 = vmatprep.mubr.f32.mxu0 0.0
  %493 = vmatmul.mubr.f32.gmra.mrb[0].mxu0 %v410
  %v494 = vpop.f32.mrb[0].mxu0
  %v495 = vadd.f32 0.0, %v494
  %v496 = vpop.f32.mrb[0].mxu0
  %497 = vdwg.mxu0
  %v498 = vmul.f32 %v395, %v395
  %v499 = vmul.f32 %v400, %v400
  %v500 = vmul.f32 %v405, %v405
  %v501 = vmul.f32 %v410, %v410
  %502 = vmatprep.subr.mxu0 0.0
  %503 = vmatpush1.msra.mxu0 %v63
  %504 = vmatprep.subr.mxu0 0.0
  %505 = vmatpush1.msra.mxu0 %v64
  %506 = vmatprep.subr.mxu0 0.0
  %507 = vmatpush1.msra.mxu0 %v65
  %508 = vmatprep.subr.mxu0 0.0
  %509 = vmatpush1.msra.mxu0 %v66
  %510 = vmatprep.subr.mxu0 0.0
  %511 = vmatpush1.msra.mxu0 %v67
  %512 = vmatprep.subr.mxu0 0.0
  %513 = vmatpush1.msra.mxu0 %v68
  %514 = vmatprep.subr.mxu0 0.0
  %515 = vmatpush1.msra.mxu0 %v69
  %516 = vmatprep.subr.mxu0 0.0
  %517 = vmatpush1.msra.mxu0 %v70
  %518 = vmatprep.subr.mxu0 0.0
  %519 = vmatpush1.msra.mxu0 %v71
  %520 = vmatprep.subr.mxu0 0.0
  %521 = vmatpush1.msra.mxu0 %v72
  %522 = vmatprep.subr.mxu0 0.0
  %523 = vmatpush1.msra.mxu0 %v73
  %524 = vmatprep.subr.mxu0 0.0
  %525 = vmatpush1.msra.mxu0 %v74
  %526 = vmatprep.subr.mxu0 0.0
  %527 = vmatpush1.msra.mxu0 %v75
  %528 = vmatprep.subr.mxu0 0.0
  %529 = vmatpush1.msra.mxu0 %v76
  %530 = vmatprep.subr.mxu0 0.0
  %531 = vmatpush1.msra.mxu0 %v77
  %532 = vmatprep.subr.mxu0 0.0
  %533 = vmatpush1.msra.mxu0 %v78
  %534 = vmatprep.subr.mxu0 0.0
  %535 = vmatpush1.msra.mxu0 0.0
  %536 = vmatprep.subr.mxu0 0.0
  %537 = vmatpush1.msra.mxu0 0.0
  %538 = vmatprep.subr.mxu0 0.0
  %539 = vmatpush1.msra.mxu0 0.0
  %540 = vmatprep.subr.mxu0 0.0
  %541 = vmatpush1.msra.mxu0 0.0
  %542 = vmatprep.subr.mxu0 0.0
  %543 = vmatpush1.msra.mxu0 0.0
  %544 = vmatprep.subr.mxu0 0.0
  %545 = vmatpush1.msra.mxu0 0.0
  %546 = vmatprep.subr.mxu0 0.0
  %547 = vmatpush1.msra.mxu0 0.0
  %548 = vmatprep.subr.mxu0 0.0
  %549 = vmatpush1.msra.mxu0 0.0
  %550 = vmatprep.subr.mxu0 0.0
  %551 = vmatpush1.msra.mxu0 0.0
  %552 = vmatprep.subr.mxu0 0.0
  %553 = vmatpush1.msra.mxu0 0.0
  %554 = vmatprep.subr.mxu0 0.0
  %555 = vmatpush1.msra.mxu0 0.0
  %556 = vmatprep.subr.mxu0 0.0
  %557 = vmatpush1.msra.mxu0 0.0
  %558 = vmatprep.subr.mxu0 0.0
  %559 = vmatpush1.msra.mxu0 0.0
  %560 = vmatprep.subr.mxu0 0.0
  %561 = vmatpush1.msra.mxu0 0.0
  %562 = vmatprep.subr.mxu0 0.0
  %563 = vmatpush1.msra.mxu0 0.0
  %564 = vmatprep.subr.mxu0 0.0
  %565 = vmatpush1.msra.mxu0 0.0
  %566 = vmatprep.mubr.f32.mxu0 0.0
  %567 = vmatmul.mubr.f32.gmra.mrb[0].mxu0 %v498
  %v568 = vpop.f32.mrb[0].mxu0
  %v569 = vadd.f32 0.0, %v568
  %v570 = vpop.f32.mrb[0].mxu0
  %571 = vmatprep.mubr.f32.mxu0 0.0
  %572 = vmatmul.mubr.f32.gmra.mrb[0].mxu0 %v499
  %v573 = vpop.f32.mrb[0].mxu0
  %v574 = vadd.f32 0.0, %v573
  %v575 = vpop.f32.mrb[0].mxu0
  %576 = vmatprep.mubr.f32.mxu0 0.0
  %577 = vmatmul.mubr.f32.gmra.mrb[0].mxu0 %v500
  %v578 = vpop.f32.mrb[0].mxu0
  %v579 = vadd.f32 0.0, %v578
  %v580 = vpop.f32.mrb[0].mxu0
  %581 = vmatprep.mubr.f32.mxu0 0.0
  %582 = vmatmul.mubr.f32.gmra.mrb[0].mxu0 %v501
  %v583 = vpop.f32.mrb[0].mxu0
  %v584 = vadd.f32 0.0, %v583
  %v585 = vpop.f32.mrb[0].mxu0
  %586 = vdwg.mxu0
  %v587 = vmul.f32 %v480, 0.125
  %v588 = vmul.f32 %v485, 0.125
  %v589 = vmul.f32 %v490, 0.125
  %v590 = vmul.f32 %v495, 0.125
  %v591 = vmul.f32 %v569, 0.125
  %v592 = vmul.f32 %v574, 0.125
  %v593 = vmul.f32 %v579, 0.125
  %v594 = vmul.f32 %v584, 0.125
  %v595 = vmul.f32 %v587, %v587
  %v596 = vmul.f32 %v588, %v588
  %v597 = vmul.f32 %v589, %v589
  %v598 = vmul.f32 %v590, %v590
  %v599 = vsub.f32 %v591, %v595
  %v600 = vsub.f32 %v592, %v596
  %v601 = vsub.f32 %v593, %v597
  %v602 = vsub.f32 %v594, %v598
  %v603 = vadd.f32 %v599, 1e-05
  %v604 = vadd.f32 %v600, 1e-05
  %v605 = vadd.f32 %v601, 1e-05
  %v606 = vadd.f32 %v602, 1e-05
  %v607 = vrsqrt.pop %v603
  %v608 = vrsqrt.pop %v604
  %v609 = vrsqrt.pop %v605
  %v610 = vrsqrt.pop %v606
  %615 = vrot.lane.b32.xlu0 %v607, 3
  %v616 = vpop.permute.xlu0 %615
  %617 = vrot.lane.b32.xlu0 %v608, 3
  %v618 = vpop.permute.xlu0 %617
  %619 = vrot.lane.b32.xlu0 %v609, 3
  %v620 = vpop.permute.xlu0 %619
  %621 = vrot.lane.b32.xlu0 %v610, 3
  %v622 = vpop.permute.xlu0 %621
  %v627 = vmul.f32 %v291, %v616
  %v628 = vmul.f32 %v292, %v618
  %v629 = vmul.f32 %v293, %v620
  %v630 = vmul.f32 %v294, %v622
  %635 = vrot.lane.b32.xlu0 %v627, 125
  %v636 = vpop.permute.xlu0 %635
  %637 = vrot.lane.b32.xlu0 %v628, 125
  %v638 = vpop.permute.xlu0 %637
  %639 = vrot.lane.b32.xlu0 %v629, 125
  %v640 = vpop.permute.xlu0 %639
  %641 = vrot.lane.b32.xlu0 %v630, 125
  %v642 = vpop.permute.xlu0 %641
  %v647 = vmul.f32 %v587, %v636
  %v648 = vmul.f32 %v588, %v638
  %v649 = vmul.f32 %v589, %v640
  %v650 = vmul.f32 %v590, %v642
  %655 = vrot.lane.b32.xlu0 %v647, 4
  %v656 = vpop.permute.xlu0 %655
  %657 = vrot.lane.b32.xlu0 %v648, 4
  %v658 = vpop.permute.xlu0 %657
  %659 = vrot.lane.b32.xlu0 %v649, 4
  %v660 = vpop.permute.xlu0 %659
  %661 = vrot.lane.b32.xlu0 %v650, 4
  %v662 = vpop.permute.xlu0 %661
  %v667 = vsub.f32 %v291, %v656
  %v668 = vsub.f32 %v292, %v658
  %v669 = vsub.f32 %v293, %v660
  %v670 = vsub.f32 %v294, %v662
  %671 = vset.pattern.permute.xlu0 3
  %672 = vperm.xlu0 %671, %v627
  %v673 = vpop.permute.xlu0 %672
  %675 = vset.pattern.permute.xlu0 3
  %676 = vperm.xlu0 %675, %v628
  %v677 = vpop.permute.xlu0 %676
  %679 = vset.pattern.permute.xlu0 3
  %680 = vperm.xlu0 %679, %v629
  %v681 = vpop.permute.xlu0 %680
  %683 = vset.pattern.permute.xlu0 3
  %684 = vperm.xlu0 %683, %v630
  %v685 = vpop.permute.xlu0 %684
  %v687 = vmul.f32 %v395, %v673
  %v688 = vmul.f32 %v400, %v677
  %v689 = vmul.f32 %v405, %v681
  %v690 = vmul.f32 %v410, %v685
  %692 = vset.pattern.permute.xlu0 4
  %693 = vperm.xlu0 %692, %v667
  %v694 = vpop.permute.xlu0 %693
  %697 = vset.pattern.permute.xlu0 4
  %698 = vperm.xlu0 %697, %v668
  %v699 = vpop.permute.xlu0 %698
  %702 = vset.pattern.permute.xlu0 4
  %703 = vperm.xlu0 %702, %v669
  %v704 = vpop.permute.xlu0 %703
  %707 = vset.pattern.permute.xlu0 4
  %708 = vperm.xlu0 %707, %v670
  %v709 = vpop.permute.xlu0 %708
  %v711 = vadd.f32 %v687, %v694
  %v712 = vadd.f32 %v688, %v699
  %v713 = vadd.f32 %v689, %v704
  %v714 = vadd.f32 %v690, %v709
  %v715 = vmax.f32 %v711, 0.0
  %v716 = vmax.f32 %v712, 0.0
  %v717 = vmax.f32 %v713, 0.0
  %v718 = vmax.f32 %v714, 0.0
  %v719 = vld [vmem:[%s2 + $0x20] sm:$0xff]
  %v720 = vld [vmem:[%s2 + $0x28] sm:$0xff]
  %722 = vset.pattern.permute.xlu0 5
  %723 = vperm.xlu0 %722, %v81
  %v724 = vpop.permute.xlu0 %723
  %727 = vset.pattern.permute.xlu0 5
  %728 = vperm.xlu0 %727, %v82
  %v729 = vpop.permute.xlu0 %728
  %vm731 = vcmask 261120
  %v733 = vsel %vm731, %v719, 0
  %v736 = vsel %vm731, %v720, 0
  %738 = vmatprep.subr.mxu0 0.0
  %739 = vmatpush1.msra.mxu0 %v715
  %740 = vmatprep.subr.mxu0 0.0
  %741 = vmatpush1.msra.mxu0 %v716
  %742 = vmatprep.subr.mxu0 0.0
  %743 = vmatpush1.msra.mxu0 %v717
  %744 = vmatprep.subr.mxu0 0.0
  %745 = vmatpush1.msra.mxu0 %v718
  %746 = vmatprep.subr.mxu0 0.0
  %747 = vmatpush1.msra.mxu0 0.0
  %748 = vmatprep.subr.mxu0 0.0
  %749 = vmatpush1.msra.mxu0 0.0
  %750 = vmatprep.subr.mxu0 0.0
  %751 = vmatpush1.msra.mxu0 0.0
  %752 = vmatprep.subr.mxu0 0.0
  %753 = vmatpush1.msra.mxu0 0.0
  %754 = vmatprep.subr.mxu0 0.0
  %755 = vmatpush1.msra.mxu0 0.0
  %756 = vmatprep.subr.mxu0 0.0
  %757 = vmatpush1.msra.mxu0 0.0
  %758 = vmatprep.subr.mxu0 0.0
  %759 = vmatpush1.msra.mxu0 0.0
  %760 = vmatprep.subr.mxu0 0.0
  %761 = vmatpush1.msra.mxu0 0.0
  %762 = vmatprep.subr.mxu0 0.0
  %763 = vmatpush1.msra.mxu0 0.0
  %764 = vmatprep.subr.mxu0 0.0
  %765 = vmatpush1.msra.mxu0 0.0
  %766 = vmatprep.subr.mxu0 0.0
  %767 = vmatpush1.msra.mxu0 0.0
  %768 = vmatprep.subr.mxu0 0.0
  %769 = vmatpush1.msra.mxu0 0.0
  %770 = vmatprep.subr.mxu0 0.0
  %771 = vmatpush1.msra.mxu0 0.0
  %772 = vmatprep.subr.mxu0 0.0
  %773 = vmatpush1.msra.mxu0 0.0
  %774 = vmatprep.subr.mxu0 0.0
  %775 = vmatpush1.msra.mxu0 0.0
  %776 = vmatprep.subr.mxu0 0.0
  %777 = vmatpush1.msra.mxu0 0.0
  %778 = vmatprep.subr.mxu0 0.0
  %779 = vmatpush1.msra.mxu0 0.0
  %780 = vmatprep.subr.mxu0 0.0
  %781 = vmatpush1.msra.mxu0 0.0
  %782 = vmatprep.subr.mxu0 0.0
  %783 = vmatpush1.msra.mxu0 0.0
  %784 = vmatprep.subr.mxu0 0.0
  %785 = vmatpush1.msra.mxu0 0.0
  %786 = vmatprep.subr.mxu0 0.0
  %787 = vmatpush1.msra.mxu0 0.0
  %788 = vmatprep.subr.mxu0 0.0
  %789 = vmatpush1.msra.mxu0 0.0
  %790 = vmatprep.subr.mxu0 0.0
  %791 = vmatpush1.msra.mxu0 0.0
  %792 = vmatprep.subr.mxu0 0.0
  %793 = vmatpush1.msra.mxu0 0.0
  %794 = vmatprep.subr.mxu0 0.0
  %795 = vmatpush1.msra.mxu0 0.0
  %796 = vmatprep.subr.mxu0 0.0
  %797 = vmatpush1.msra.mxu0 0.0
  %798 = vmatprep.subr.mxu0 0.0
  %799 = vmatpush1.msra.mxu0 0.0
  %800 = vmatprep.subr.mxu0 0.0
  %801 = vmatpush1.msra.mxu0 0.0
  %802 = vmatprep.mubr.f32.mxu0 0.0
  %803 = vmatmul.mubr.f32.gmra.mrb[0].mxu0 %v733
  %v804 = vpop.f32.mrb[0].mxu0
  %v805 = vadd.f32 %v724, %v804
  %v806 = vpop.f32.mrb[0].mxu0
  %807 = vmatprep.mubr.f32.mxu0 0.0
  %808 = vmatmul.mubr.f32.gmra.mrb[0].mxu0 %v736
  %v809 = vpop.f32.mrb[0].mxu0
  %v810 = vadd.f32 %v729, %v809
  %v811 = vpop.f32.mrb[0].mxu0
  %812 = vdwg.mxu0
  %813 = vmatprep.subr.mxu0 0.0
  %814 = vmatpush1.msra.mxu0 %v63
  %815 = vmatprep.subr.mxu0 0.0
  %816 = vmatpush1.msra.mxu0 %v64
  %817 = vmatprep.subr.mxu0 0.0
  %818 = vmatpush1.msra.mxu0 %v65
  %819 = vmatprep.subr.mxu0 0.0
  %820 = vmatpush1.msra.mxu0 %v66
  %821 = vmatprep.subr.mxu0 0.0
  %822 = vmatpush1.msra.mxu0 %v67
  %823 = vmatprep.subr.mxu0 0.0
  %824 = vmatpush1.msra.mxu0 %v68
  %825 = vmatprep.subr.mxu0 0.0
  %826 = vmatpush1.msra.mxu0 %v69
  %827 = vmatprep.subr.mxu0 0.0
  %828 = vmatpush1.msra.mxu0 %v70
  %829 = vmatprep.subr.mxu0 0.0
  %830 = vmatpush1.msra.mxu0 %v71
  %831 = vmatprep.subr.mxu0 0.0
  %832 = vmatpush1.msra.mxu0 %v72
  %833 = vmatprep.subr.mxu0 0.0
  %834 = vmatpush1.msra.mxu0 %v73
  %835 = vmatprep.subr.mxu0 0.0
  %836 = vmatpush1.msra.mxu0 %v74
  %837 = vmatprep.subr.mxu0 0.0
  %838 = vmatpush1.msra.mxu0 %v75
  %839 = vmatprep.subr.mxu0 0.0
  %840 = vmatpush1.msra.mxu0 %v76
  %841 = vmatprep.subr.mxu0 0.0
  %842 = vmatpush1.msra.mxu0 %v77
  %843 = vmatprep.subr.mxu0 0.0
  %844 = vmatpush1.msra.mxu0 %v78
  %845 = vmatprep.subr.mxu0 0.0
  %846 = vmatpush1.msra.mxu0 0.0
  %847 = vmatprep.subr.mxu0 0.0
  %848 = vmatpush1.msra.mxu0 0.0
  %849 = vmatprep.subr.mxu0 0.0
  %850 = vmatpush1.msra.mxu0 0.0
  %851 = vmatprep.subr.mxu0 0.0
  %852 = vmatpush1.msra.mxu0 0.0
  %853 = vmatprep.subr.mxu0 0.0
  %854 = vmatpush1.msra.mxu0 0.0
  %855 = vmatprep.subr.mxu0 0.0
  %856 = vmatpush1.msra.mxu0 0.0
  %857 = vmatprep.subr.mxu0 0.0
  %858 = vmatpush1.msra.mxu0 0.0
  %859 = vmatprep.subr.mxu0 0.0
  %860 = vmatpush1.msra.mxu0 0.0
  %861 = vmatprep.subr.mxu0 0.0
  %862 = vmatpush1.msra.mxu0 0.0
  %863 = vmatprep.subr.mxu0 0.0
  %864 = vmatpush1.msra.mxu0 0.0
  %865 = vmatprep.subr.mxu0 0.0
  %866 = vmatpush1.msra.mxu0 0.0
  %867 = vmatprep.subr.mxu0 0.0
  %868 = vmatpush1.msra.mxu0 0.0
  %869 = vmatprep.subr.mxu0 0.0
  %870 = vmatpush1.msra.mxu0 0.0
  %871 = vmatprep.subr.mxu0 0.0
  %872 = vmatpush1.msra.mxu0 0.0
  %873 = vmatprep.subr.mxu0 0.0
  %874 = vmatpush1.msra.mxu0 0.0
  %875 = vmatprep.subr.mxu0 0.0
  %876 = vmatpush1.msra.mxu0 0.0
  %877 = vmatprep.mubr.f32.mxu0 0.0
  %878 = vmatmul.mubr.f32.gmra.mrb[0].mxu0 %v805
  %v879 = vpop.f32.mrb[0].mxu0
  %v880 = vadd.f32 0.0, %v879
  %v881 = vpop.f32.mrb[0].mxu0
  %882 = vmatprep.mubr.f32.mxu0 0.0
  %883 = vmatmul.mubr.f32.gmra.mrb[0].mxu0 %v810
  %v884 = vpop.f32.mrb[0].mxu0
  %v885 = vadd.f32 0.0, %v884
  %v886 = vpop.f32.mrb[0].mxu0
  %887 = vdwg.mxu0
  %v888 = vmul.f32 %v805, %v805
  %v889 = vmul.f32 %v810, %v810
  %890 = vmatprep.subr.mxu0 0.0
  %891 = vmatpush1.msra.mxu0 %v63
  %892 = vmatprep.subr.mxu0 0.0
  %893 = vmatpush1.msra.mxu0 %v64
  %894 = vmatprep.subr.mxu0 0.0
  %895 = vmatpush1.msra.mxu0 %v65
  %896 = vmatprep.subr.mxu0 0.0
  %897 = vmatpush1.msra.mxu0 %v66
  %898 = vmatprep.subr.mxu0 0.0
  %899 = vmatpush1.msra.mxu0 %v67
  %900 = vmatprep.subr.mxu0 0.0
  %901 = vmatpush1.msra.mxu0 %v68
  %902 = vmatprep.subr.mxu0 0.0
  %903 = vmatpush1.msra.mxu0 %v69
  %904 = vmatprep.subr.mxu0 0.0
  %905 = vmatpush1.msra.mxu0 %v70
  %906 = vmatprep.subr.mxu0 0.0
  %907 = vmatpush1.msra.mxu0 %v71
  %908 = vmatprep.subr.mxu0 0.0
  %909 = vmatpush1.msra.mxu0 %v72
  %910 = vmatprep.subr.mxu0 0.0
  %911 = vmatpush1.msra.mxu0 %v73
  %912 = vmatprep.subr.mxu0 0.0
  %913 = vmatpush1.msra.mxu0 %v74
  %914 = vmatprep.subr.mxu0 0.0
  %915 = vmatpush1.msra.mxu0 %v75
  %916 = vmatprep.subr.mxu0 0.0
  %917 = vmatpush1.msra.mxu0 %v76
  %918 = vmatprep.subr.mxu0 0.0
  %919 = vmatpush1.msra.mxu0 %v77
  %920 = vmatprep.subr.mxu0 0.0
  %921 = vmatpush1.msra.mxu0 %v78
  %922 = vmatprep.subr.mxu0 0.0
  %923 = vmatpush1.msra.mxu0 0.0
  %924 = vmatprep.subr.mxu0 0.0
  %925 = vmatpush1.msra.mxu0 0.0
  %926 = vmatprep.subr.mxu0 0.0
  %927 = vmatpush1.msra.mxu0 0.0
  %928 = vmatprep.subr.mxu0 0.0
  %929 = vmatpush1.msra.mxu0 0.0
  %930 = vmatprep.subr.mxu0 0.0
  %931 = vmatpush1.msra.mxu0 0.0
  %932 = vmatprep.subr.mxu0 0.0
  %933 = vmatpush1.msra.mxu0 0.0
  %934 = vmatprep.subr.mxu0 0.0
  %935 = vmatpush1.msra.mxu0 0.0
  %936 = vmatprep.subr.mxu0 0.0
  %937 = vmatpush1.msra.mxu0 0.0
  %938 = vmatprep.subr.mxu0 0.0
  %939 = vmatpush1.msra.mxu0 0.0
  %940 = vmatprep.subr.mxu0 0.0
  %941 = vmatpush1.msra.mxu0 0.0
  %942 = vmatprep.subr.mxu0 0.0
  %943 = vmatpush1.msra.mxu0 0.0
  %944 = vmatprep.subr.mxu0 0.0
  %945 = vmatpush1.msra.mxu0 0.0
  %946 = vmatprep.subr.mxu0 0.0
  %947 = vmatpush1.msra.mxu0 0.0
  %948 = vmatprep.subr.mxu0 0.0
  %949 = vmatpush1.msra.mxu0 0.0
  %950 = vmatprep.subr.mxu0 0.0
  %951 = vmatpush1.msra.mxu0 0.0
  %952 = vmatprep.subr.mxu0 0.0
  %953 = vmatpush1.msra.mxu0 0.0
  %954 = vmatprep.mubr.f32.mxu0 0.0
  %955 = vmatmul.mubr.f32.gmra.mrb[0].mxu0 %v888
  %v956 = vpop.f32.mrb[0].mxu0
  %v957 = vadd.f32 0.0, %v956
  %v958 = vpop.f32.mrb[0].mxu0
  %959 = vmatprep.mubr.f32.mxu0 0.0
  %960 = vmatmul.mubr.f32.gmra.mrb[0].mxu0 %v889
  %v961 = vpop.f32.mrb[0].mxu0
  %v962 = vadd.f32 0.0, %v961
  %v963 = vpop.f32.mrb[0].mxu0
  %964 = vdwg.mxu0
  %v965 = vmul.f32 %v880, 0.125
  %v966 = vmul.f32 %v885, 0.125
  %v967 = vmul.f32 %v957, 0.125
  %v968 = vmul.f32 %v962, 0.125
  %v969 = vmul.f32 %v965, %v965
  %v970 = vmul.f32 %v966, %v966
  %v971 = vsub.f32 %v967, %v969
  %v972 = vsub.f32 %v968, %v970
  %v973 = vadd.f32 %v971, 1e-05
  %v974 = vadd.f32 %v972, 1e-05
  %v975 = vrsqrt.pop %v973
  %v976 = vrsqrt.pop %v974
  %979 = vrot.lane.b32.xlu0 %v975, 6
  %v980 = vpop.permute.xlu0 %979
  %981 = vrot.lane.b32.xlu0 %v976, 6
  %v982 = vpop.permute.xlu0 %981
  %v985 = vmul.f32 %v81, %v980
  %v986 = vmul.f32 %v82, %v982
  %989 = vrot.lane.b32.xlu0 %v985, 122
  %v990 = vpop.permute.xlu0 %989
  %991 = vrot.lane.b32.xlu0 %v986, 122
  %v992 = vpop.permute.xlu0 %991
  %v995 = vmul.f32 %v965, %v990
  %v996 = vmul.f32 %v966, %v992
  %999 = vrot.lane.b32.xlu0 %v995, 7
  %v1000 = vpop.permute.xlu0 %999
  %1001 = vrot.lane.b32.xlu0 %v996, 7
  %v1002 = vpop.permute.xlu0 %1001
  %v1005 = vsub.f32 %v81, %v1000
  %v1006 = vsub.f32 %v82, %v1002
  %1007 = vset.pattern.permute.xlu0 6
  %1008 = vperm.xlu0 %1007, %v985
  %v1009 = vpop.permute.xlu0 %1008
  %1011 = vset.pattern.permute.xlu0 6
  %1012 = vperm.xlu0 %1011, %v986
  %v1013 = vpop.permute.xlu0 %1012
  %v1015 = vmul.f32 %v805, %v1009
  %v1016 = vmul.f32 %v810, %v1013
  %1018 = vset.pattern.permute.xlu0 7
  %1019 = vperm.xlu0 %1018, %v1005
  %v1020 = vpop.permute.xlu0 %1019
  %1023 = vset.pattern.permute.xlu0 7
  %1024 = vperm.xlu0 %1023, %v1006
  %v1025 = vpop.permute.xlu0 %1024
  %v1027 = vadd.f32 %v1015, %v1020
  %v1028 = vadd.f32 %v1016, %v1025
  %v1029 = vmax.f32 %v1027, 0.0
  %v1030 = vmax.f32 %v1028, 0.0
  %v1031 = vld [vmem:[%s2 + $0x30] sm:$0xff]
  %v1032 = vld [vmem:[%s1] sm:$0xff]
  %1034 = vset.pattern.permute.xlu0 8
  %1035 = vperm.xlu0 %1034, %v1032
  %v1036 = vpop.permute.xlu0 %1035
  %v1039 = vsel %vm315, %v1031, 0
  %1041 = vmatprep.subr.mxu0 0.0
  %1042 = vmatpush1.msra.mxu0 %v1029
  %1043 = vmatprep.subr.mxu0 0.0
  %1044 = vmatpush1.msra.mxu0 %v1030
  %1045 = vmatprep.subr.mxu0 0.0
  %1046 = vmatpush1.msra.mxu0 0.0
  %1047 = vmatprep.subr.mxu0 0.0
  %1048 = vmatpush1.msra.mxu0 0.0
  %1049 = vmatprep.subr.mxu0 0.0
  %1050 = vmatpush1.msra.mxu0 0.0
  %1051 = vmatprep.subr.mxu0 0.0
  %1052 = vmatpush1.msra.mxu0 0.0
  %1053 = vmatprep.subr.mxu0 0.0
  %1054 = vmatpush1.msra.mxu0 0.0
  %1055 = vmatprep.subr.mxu0 0.0
  %1056 = vmatpush1.msra.mxu0 0.0
  %1057 = vmatprep.subr.mxu0 0.0
  %1058 = vmatpush1.msra.mxu0 0.0
  %1059 = vmatprep.subr.mxu0 0.0
  %1060 = vmatpush1.msra.mxu0 0.0
  %1061 = vmatprep.subr.mxu0 0.0
  %1062 = vmatpush1.msra.mxu0 0.0
  %1063 = vmatprep.subr.mxu0 0.0
  %1064 = vmatpush1.msra.mxu0 0.0
  %1065 = vmatprep.subr.mxu0 0.0
  %1066 = vmatpush1.msra.mxu0 0.0
  %1067 = vmatprep.subr.mxu0 0.0
  %1068 = vmatpush1.msra.mxu0 0.0
  %1069 = vmatprep.subr.mxu0 0.0
  %1070 = vmatpush1.msra.mxu0 0.0
  %1071 = vmatprep.subr.mxu0 0.0
  %1072 = vmatpush1.msra.mxu0 0.0
  %1073 = vmatprep.subr.mxu0 0.0
  %1074 = vmatpush1.msra.mxu0 0.0
  %1075 = vmatprep.subr.mxu0 0.0
  %1076 = vmatpush1.msra.mxu0 0.0
  %1077 = vmatprep.subr.mxu0 0.0
  %1078 = vmatpush1.msra.mxu0 0.0
  %1079 = vmatprep.subr.mxu0 0.0
  %1080 = vmatpush1.msra.mxu0 0.0
  %1081 = vmatprep.subr.mxu0 0.0
  %1082 = vmatpush1.msra.mxu0 0.0
  %1083 = vmatprep.subr.mxu0 0.0
  %1084 = vmatpush1.msra.mxu0 0.0
  %1085 = vmatprep.subr.mxu0 0.0
  %1086 = vmatpush1.msra.mxu0 0.0
  %1087 = vmatprep.subr.mxu0 0.0
  %1088 = vmatpush1.msra.mxu0 0.0
  %1089 = vmatprep.subr.mxu0 0.0
  %1090 = vmatpush1.msra.mxu0 0.0
  %1091 = vmatprep.subr.mxu0 0.0
  %1092 = vmatpush1.msra.mxu0 0.0
  %1093 = vmatprep.subr.mxu0 0.0
  %1094 = vmatpush1.msra.mxu0 0.0
  %1095 = vmatprep.subr.mxu0 0.0
  %1096 = vmatpush1.msra.mxu0 0.0
  %1097 = vmatprep.subr.mxu0 0.0
  %1098 = vmatpush1.msra.mxu0 0.0
  %1099 = vmatprep.subr.mxu0 0.0
  %1100 = vmatpush1.msra.mxu0 0.0
  %1101 = vmatprep.subr.mxu0 0.0
  %1102 = vmatpush1.msra.mxu0 0.0
  %1103 = vmatprep.subr.mxu0 0.0
  %1104 = vmatpush1.msra.mxu0 0.0
  %1105 = vmatprep.mubr.f32.mxu0 0.0
  %1106 = vmatmul.mubr.f32.gmra.mrb[0].mxu0 %v1039
  %v1107 = vpop.f32.mrb[0].mxu0
  %v1108 = vadd.f32 %v1036, %v1107
  %v1109 = vpop.f32.mrb[0].mxu0
  %1110 = vdwg.mxu0
  %1111 = vmatprep.subr.mxu0 0.0
  %1112 = vmatpush1.msra.mxu0 %v63
  %1113 = vmatprep.subr.mxu0 0.0
  %1114 = vmatpush1.msra.mxu0 %v64
  %1115 = vmatprep.subr.mxu0 0.0
  %1116 = vmatpush1.msra.mxu0 %v65
  %1117 = vmatprep.subr.mxu0 0.0
  %1118 = vmatpush1.msra.mxu0 %v66
  %1119 = vmatprep.subr.mxu0 0.0
  %1120 = vmatpush1.msra.mxu0 %v67
  %1121 = vmatprep.subr.mxu0 0.0
  %1122 = vmatpush1.msra.mxu0 %v68
  %1123 = vmatprep.subr.mxu0 0.0
  %1124 = vmatpush1.msra.mxu0 %v69
  %1125 = vmatprep.subr.mxu0 0.0
  %1126 = vmatpush1.msra.mxu0 %v70
  %1127 = vmatprep.subr.mxu0 0.0
  %1128 = vmatpush1.msra.mxu0 %v71
  %1129 = vmatprep.subr.mxu0 0.0
  %1130 = vmatpush1.msra.mxu0 %v72
  %1131 = vmatprep.subr.mxu0 0.0
  %1132 = vmatpush1.msra.mxu0 %v73
  %1133 = vmatprep.subr.mxu0 0.0
  %1134 = vmatpush1.msra.mxu0 %v74
  %1135 = vmatprep.subr.mxu0 0.0
  %1136 = vmatpush1.msra.mxu0 %v75
  %1137 = vmatprep.subr.mxu0 0.0
  %1138 = vmatpush1.msra.mxu0 %v76
  %1139 = vmatprep.subr.mxu0 0.0
  %1140 = vmatpush1.msra.mxu0 %v77
  %1141 = vmatprep.subr.mxu0 0.0
  %1142 = vmatpush1.msra.mxu0 %v78
  %1143 = vmatprep.subr.mxu0 0.0
  %1144 = vmatpush1.msra.mxu0 0.0
  %1145 = vmatprep.subr.mxu0 0.0
  %1146 = vmatpush1.msra.mxu0 0.0
  %1147 = vmatprep.subr.mxu0 0.0
  %1148 = vmatpush1.msra.mxu0 0.0
  %1149 = vmatprep.subr.mxu0 0.0
  %1150 = vmatpush1.msra.mxu0 0.0
  %1151 = vmatprep.subr.mxu0 0.0
  %1152 = vmatpush1.msra.mxu0 0.0
  %1153 = vmatprep.subr.mxu0 0.0
  %1154 = vmatpush1.msra.mxu0 0.0
  %1155 = vmatprep.subr.mxu0 0.0
  %1156 = vmatpush1.msra.mxu0 0.0
  %1157 = vmatprep.subr.mxu0 0.0
  %1158 = vmatpush1.msra.mxu0 0.0
  %1159 = vmatprep.subr.mxu0 0.0
  %1160 = vmatpush1.msra.mxu0 0.0
  %1161 = vmatprep.subr.mxu0 0.0
  %1162 = vmatpush1.msra.mxu0 0.0
  %1163 = vmatprep.subr.mxu0 0.0
  %1164 = vmatpush1.msra.mxu0 0.0
  %1165 = vmatprep.subr.mxu0 0.0
  %1166 = vmatpush1.msra.mxu0 0.0
  %1167 = vmatprep.subr.mxu0 0.0
  %1168 = vmatpush1.msra.mxu0 0.0
  %1169 = vmatprep.subr.mxu0 0.0
  %1170 = vmatpush1.msra.mxu0 0.0
  %1171 = vmatprep.subr.mxu0 0.0
  %1172 = vmatpush1.msra.mxu0 0.0
  %1173 = vmatprep.subr.mxu0 0.0
  %1174 = vmatpush1.msra.mxu0 0.0
  %1175 = vmatprep.mubr.f32.mxu0 0.0
  %1176 = vmatmul.mubr.f32.gmra.mrb[0].mxu0 %v1108
  %v1177 = vpop.f32.mrb[0].mxu0
  %v1178 = vadd.f32 0.0, %v1177
  %v1179 = vpop.f32.mrb[0].mxu0
  %1180 = vdwg.mxu0
  %v1181 = vmul.f32 %v1108, %v1108
  %1182 = vmatprep.subr.mxu0 0.0
  %1183 = vmatpush1.msra.mxu0 %v63
  %1184 = vmatprep.subr.mxu0 0.0
  %1185 = vmatpush1.msra.mxu0 %v64
  %1186 = vmatprep.subr.mxu0 0.0
  %1187 = vmatpush1.msra.mxu0 %v65
  %1188 = vmatprep.subr.mxu0 0.0
  %1189 = vmatpush1.msra.mxu0 %v66
  %1190 = vmatprep.subr.mxu0 0.0
  %1191 = vmatpush1.msra.mxu0 %v67
  %1192 = vmatprep.subr.mxu0 0.0
  %1193 = vmatpush1.msra.mxu0 %v68
  %1194 = vmatprep.subr.mxu0 0.0
  %1195 = vmatpush1.msra.mxu0 %v69
  %1196 = vmatprep.subr.mxu0 0.0
  %1197 = vmatpush1.msra.mxu0 %v70
  %1198 = vmatprep.subr.mxu0 0.0
  %1199 = vmatpush1.msra.mxu0 %v71
  %1200 = vmatprep.subr.mxu0 0.0
  %1201 = vmatpush1.msra.mxu0 %v72
  %1202 = vmatprep.subr.mxu0 0.0
  %1203 = vmatpush1.msra.mxu0 %v73
  %1204 = vmatprep.subr.mxu0 0.0
  %1205 = vmatpush1.msra.mxu0 %v74
  %1206 = vmatprep.subr.mxu0 0.0
  %1207 = vmatpush1.msra.mxu0 %v75
  %1208 = vmatprep.subr.mxu0 0.0
  %1209 = vmatpush1.msra.mxu0 %v76
  %1210 = vmatprep.subr.mxu0 0.0
  %1211 = vmatpush1.msra.mxu0 %v77
  %1212 = vmatprep.subr.mxu0 0.0
  %1213 = vmatpush1.msra.mxu0 %v78
  %1214 = vmatprep.subr.mxu0 0.0
  %1215 = vmatpush1.msra.mxu0 0.0
  %1216 = vmatprep.subr.mxu0 0.0
  %1217 = vmatpush1.msra.mxu0 0.0
  %1218 = vmatprep.subr.mxu0 0.0
  %1219 = vmatpush1.msra.mxu0 0.0
  %1220 = vmatprep.subr.mxu0 0.0
  %1221 = vmatpush1.msra.mxu0 0.0
  %1222 = vmatprep.subr.mxu0 0.0
  %1223 = vmatpush1.msra.mxu0 0.0
  %1224 = vmatprep.subr.mxu0 0.0
  %1225 = vmatpush1.msra.mxu0 0.0
  %1226 = vmatprep.subr.mxu0 0.0
  %1227 = vmatpush1.msra.mxu0 0.0
  %1228 = vmatprep.subr.mxu0 0.0
  %1229 = vmatpush1.msra.mxu0 0.0
  %1230 = vmatprep.subr.mxu0 0.0
  %1231 = vmatpush1.msra.mxu0 0.0
  %1232 = vmatprep.subr.mxu0 0.0
  %1233 = vmatpush1.msra.mxu0 0.0
  %1234 = vmatprep.subr.mxu0 0.0
  %1235 = vmatpush1.msra.mxu0 0.0
  %1236 = vmatprep.subr.mxu0 0.0
  %1237 = vmatpush1.msra.mxu0 0.0
  %1238 = vmatprep.subr.mxu0 0.0
  %1239 = vmatpush1.msra.mxu0 0.0
  %1240 = vmatprep.subr.mxu0 0.0
  %1241 = vmatpush1.msra.mxu0 0.0
  %1242 = vmatprep.subr.mxu0 0.0
  %1243 = vmatpush1.msra.mxu0 0.0
  %1244 = vmatprep.subr.mxu0 0.0
  %1245 = vmatpush1.msra.mxu0 0.0
  %1246 = vmatprep.mubr.f32.mxu0 0.0
  %1247 = vmatmul.mubr.f32.gmra.mrb[0].mxu0 %v1181
  %v1248 = vpop.f32.mrb[0].mxu0
  %v1249 = vadd.f32 0.0, %v1248
  %v1250 = vpop.f32.mrb[0].mxu0
  %1251 = vdwg.mxu0
  %v1252 = vmul.f32 %v1178, 0.125
  %v1253 = vmul.f32 %v1249, 0.125
  %v1254 = vmul.f32 %v1252, %v1252
  %v1255 = vsub.f32 %v1253, %v1254
  %v1256 = vadd.f32 %v1255, 1e-05
  %v1257 = vrsqrt.pop %v1256
  %1259 = vrot.lane.b32.xlu0 %v1257, 9
  %v1260 = vpop.permute.xlu0 %1259
  %v1262 = vmul.f32 %v1032, %v1260
  %1264 = vrot.lane.b32.xlu0 %v1262, 119
  %v1265 = vpop.permute.xlu0 %1264
  %v1267 = vmul.f32 %v1252, %v1265
  %1269 = vrot.lane.b32.xlu0 %v1267, 10
  %v1270 = vpop.permute.xlu0 %1269
  %v1272 = vsub.f32 %v1032, %v1270
  %1273 = vset.pattern.permute.xlu0 9
  %1274 = vperm.xlu0 %1273, %v1262
  %v1275 = vpop.permute.xlu0 %1274
  %v1277 = vmul.f32 %v1108, %v1275
  %1279 = vset.pattern.permute.xlu0 10
  %1280 = vperm.xlu0 %1279, %v1272
  %v1281 = vpop.permute.xlu0 %1280
  %v1283 = vadd.f32 %v1277, %v1281
  %v1284 = vmax.f32 %v1283, 0.0
  %v1285 = vld [vmem:[%s2 + $0x38] sm:$0xff]
  %1286 = vset.pattern.permute.xlu0 11
  %1287 = vperm.xlu0 %1286, %v1032
  %v1288 = vpop.permute.xlu0 %1287
  %vm1290 = vcmask 64512
  %v1292 = vsel %vm1290, %v1285, 0
  %1294 = vmatprep.subr.mxu0 0.0
  %1295 = vmatpush1.msra.mxu0 %v1284
  %1296 = vmatprep.subr.mxu0 0.0
  %1297 = vmatpush1.msra.mxu0 0.0
  %1298 = vmatprep.subr.mxu0 0.0
  %1299 = vmatpush1.msra.mxu0 0.0
  %1300 = vmatprep.subr.mxu0 0.0
  %1301 = vmatpush1.msra.mxu0 0.0
  %1302 = vmatprep.subr.mxu0 0.0
  %1303 = vmatpush1.msra.mxu0 0.0
  %1304 = vmatprep.subr.mxu0 0.0
  %1305 = vmatpush1.msra.mxu0 0.0
  %1306 = vmatprep.subr.mxu0 0.0
  %1307 = vmatpush1.msra.mxu0 0.0
  %1308 = vmatprep.subr.mxu0 0.0
  %1309 = vmatpush1.msra.mxu0 0.0
  %1310 = vmatprep.subr.mxu0 0.0
  %1311 = vmatpush1.msra.mxu0 0.0
  %1312 = vmatprep.subr.mxu0 0.0
  %1313 = vmatpush1.msra.mxu0 0.0
  %1314 = vmatprep.subr.mxu0 0.0
  %1315 = vmatpush1.msra.mxu0 0.0
  %1316 = vmatprep.subr.mxu0 0.0
  %1317 = vmatpush1.msra.mxu0 0.0
  %1318 = vmatprep.subr.mxu0 0.0
  %1319 = vmatpush1.msra.mxu0 0.0
  %1320 = vmatprep.subr.mxu0 0.0
  %1321 = vmatpush1.msra.mxu0 0.0
  %1322 = vmatprep.subr.mxu0 0.0
  %1323 = vmatpush1.msra.mxu0 0.0
  %1324 = vmatprep.subr.mxu0 0.0
  %1325 = vmatpush1.msra.mxu0 0.0
  %1326 = vmatprep.subr.mxu0 0.0
  %1327 = vmatpush1.msra.mxu0 0.0
  %1328 = vmatprep.subr.mxu0 0.0
  %1329 = vmatpush1.msra.mxu0 0.0
  %1330 = vmatprep.subr.mxu0 0.0
  %1331 = vmatpush1.msra.mxu0 0.0
  %1332 = vmatprep.subr.mxu0 0.0
  %1333 = vmatpush1.msra.mxu0 0.0
  %1334 = vmatprep.subr.mxu0 0.0
  %1335 = vmatpush1.msra.mxu0 0.0
  %1336 = vmatprep.subr.mxu0 0.0
  %1337 = vmatpush1.msra.mxu0 0.0
  %1338 = vmatprep.subr.mxu0 0.0
  %1339 = vmatpush1.msra.mxu0 0.0
  %1340 = vmatprep.subr.mxu0 0.0
  %1341 = vmatpush1.msra.mxu0 0.0
  %1342 = vmatprep.subr.mxu0 0.0
  %1343 = vmatpush1.msra.mxu0 0.0
  %1344 = vmatprep.subr.mxu0 0.0
  %1345 = vmatpush1.msra.mxu0 0.0
  %1346 = vmatprep.subr.mxu0 0.0
  %1347 = vmatpush1.msra.mxu0 0.0
  %1348 = vmatprep.subr.mxu0 0.0
  %1349 = vmatpush1.msra.mxu0 0.0
  %1350 = vmatprep.subr.mxu0 0.0
  %1351 = vmatpush1.msra.mxu0 0.0
  %1352 = vmatprep.subr.mxu0 0.0
  %1353 = vmatpush1.msra.mxu0 0.0
  %1354 = vmatprep.subr.mxu0 0.0
  %1355 = vmatpush1.msra.mxu0 0.0
  %1356 = vmatprep.subr.mxu0 0.0
  %1357 = vmatpush1.msra.mxu0 0.0
  %1358 = vmatprep.mubr.f32.mxu0 0.0
  %1359 = vmatmul.mubr.f32.gmra.mrb[0].mxu0 %v1292
  %v1360 = vpop.f32.mrb[0].mxu0
  %v1361 = vadd.f32 %v1288, %v1360
  %v1362 = vpop.f32.mrb[0].mxu0
  %1363 = vdwg.mxu0
  %1364 = vmatprep.subr.mxu0 0.0
  %1365 = vmatpush1.msra.mxu0 %v63
  %1366 = vmatprep.subr.mxu0 0.0
  %1367 = vmatpush1.msra.mxu0 %v64
  %1368 = vmatprep.subr.mxu0 0.0
  %1369 = vmatpush1.msra.mxu0 %v65
  %1370 = vmatprep.subr.mxu0 0.0
  %1371 = vmatpush1.msra.mxu0 %v66
  %1372 = vmatprep.subr.mxu0 0.0
  %1373 = vmatpush1.msra.mxu0 %v67
  %1374 = vmatprep.subr.mxu0 0.0
  %1375 = vmatpush1.msra.mxu0 %v68
  %1376 = vmatprep.subr.mxu0 0.0
  %1377 = vmatpush1.msra.mxu0 %v69
  %1378 = vmatprep.subr.mxu0 0.0
  %1379 = vmatpush1.msra.mxu0 %v70
  %1380 = vmatprep.subr.mxu0 0.0
  %1381 = vmatpush1.msra.mxu0 %v71
  %1382 = vmatprep.subr.mxu0 0.0
  %1383 = vmatpush1.msra.mxu0 %v72
  %1384 = vmatprep.subr.mxu0 0.0
  %1385 = vmatpush1.msra.mxu0 %v73
  %1386 = vmatprep.subr.mxu0 0.0
  %1387 = vmatpush1.msra.mxu0 %v74
  %1388 = vmatprep.subr.mxu0 0.0
  %1389 = vmatpush1.msra.mxu0 %v75
  %1390 = vmatprep.subr.mxu0 0.0
  %1391 = vmatpush1.msra.mxu0 %v76
  %1392 = vmatprep.subr.mxu0 0.0
  %1393 = vmatpush1.msra.mxu0 %v77
  %1394 = vmatprep.subr.mxu0 0.0
  %1395 = vmatpush1.msra.mxu0 %v78
  %1396 = vmatprep.subr.mxu0 0.0
  %1397 = vmatpush1.msra.mxu0 0.0
  %1398 = vmatprep.subr.mxu0 0.0
  %1399 = vmatpush1.msra.mxu0 0.0
  %1400 = vmatprep.subr.mxu0 0.0
  %1401 = vmatpush1.msra.mxu0 0.0
  %1402 = vmatprep.subr.mxu0 0.0
  %1403 = vmatpush1.msra.mxu0 0.0
  %1404 = vmatprep.subr.mxu0 0.0
  %1405 = vmatpush1.msra.mxu0 0.0
  %1406 = vmatprep.subr.mxu0 0.0
  %1407 = vmatpush1.msra.mxu0 0.0
  %1408 = vmatprep.subr.mxu0 0.0
  %1409 = vmatpush1.msra.mxu0 0.0
  %1410 = vmatprep.subr.mxu0 0.0
  %1411 = vmatpush1.msra.mxu0 0.0
  %1412 = vmatprep.subr.mxu0 0.0
  %1413 = vmatpush1.msra.mxu0 0.0
  %1414 = vmatprep.subr.mxu0 0.0
  %1415 = vmatpush1.msra.mxu0 0.0
  %1416 = vmatprep.subr.mxu0 0.0
  %1417 = vmatpush1.msra.mxu0 0.0
  %1418 = vmatprep.subr.mxu0 0.0
  %1419 = vmatpush1.msra.mxu0 0.0
  %1420 = vmatprep.subr.mxu0 0.0
  %1421 = vmatpush1.msra.mxu0 0.0
  %1422 = vmatprep.subr.mxu0 0.0
  %1423 = vmatpush1.msra.mxu0 0.0
  %1424 = vmatprep.subr.mxu0 0.0
  %1425 = vmatpush1.msra.mxu0 0.0
  %1426 = vmatprep.subr.mxu0 0.0
  %1427 = vmatpush1.msra.mxu0 0.0
  %1428 = vmatprep.mubr.f32.mxu0 0.0
  %1429 = vmatmul.mubr.f32.gmra.mrb[0].mxu0 %v1361
  %v1430 = vpop.f32.mrb[0].mxu0
  %v1431 = vadd.f32 0.0, %v1430
  %v1432 = vpop.f32.mrb[0].mxu0
  %1433 = vdwg.mxu0
  %v1434 = vmul.f32 %v1361, %v1361
  %1435 = vmatprep.subr.mxu0 0.0
  %1436 = vmatpush1.msra.mxu0 %v63
  %1437 = vmatprep.subr.mxu0 0.0
  %1438 = vmatpush1.msra.mxu0 %v64
  %1439 = vmatprep.subr.mxu0 0.0
  %1440 = vmatpush1.msra.mxu0 %v65
  %1441 = vmatprep.subr.mxu0 0.0
  %1442 = vmatpush1.msra.mxu0 %v66
  %1443 = vmatprep.subr.mxu0 0.0
  %1444 = vmatpush1.msra.mxu0 %v67
  %1445 = vmatprep.subr.mxu0 0.0
  %1446 = vmatpush1.msra.mxu0 %v68
  %1447 = vmatprep.subr.mxu0 0.0
  %1448 = vmatpush1.msra.mxu0 %v69
  %1449 = vmatprep.subr.mxu0 0.0
  %1450 = vmatpush1.msra.mxu0 %v70
  %1451 = vmatprep.subr.mxu0 0.0
  %1452 = vmatpush1.msra.mxu0 %v71
  %1453 = vmatprep.subr.mxu0 0.0
  %1454 = vmatpush1.msra.mxu0 %v72
  %1455 = vmatprep.subr.mxu0 0.0
  %1456 = vmatpush1.msra.mxu0 %v73
  %1457 = vmatprep.subr.mxu0 0.0
  %1458 = vmatpush1.msra.mxu0 %v74
  %1459 = vmatprep.subr.mxu0 0.0
  %1460 = vmatpush1.msra.mxu0 %v75
  %1461 = vmatprep.subr.mxu0 0.0
  %1462 = vmatpush1.msra.mxu0 %v76
  %1463 = vmatprep.subr.mxu0 0.0
  %1464 = vmatpush1.msra.mxu0 %v77
  %1465 = vmatprep.subr.mxu0 0.0
  %1466 = vmatpush1.msra.mxu0 %v78
  %1467 = vmatprep.subr.mxu0 0.0
  %1468 = vmatpush1.msra.mxu0 0.0
  %1469 = vmatprep.subr.mxu0 0.0
  %1470 = vmatpush1.msra.mxu0 0.0
  %1471 = vmatprep.subr.mxu0 0.0
  %1472 = vmatpush1.msra.mxu0 0.0
  %1473 = vmatprep.subr.mxu0 0.0
  %1474 = vmatpush1.msra.mxu0 0.0
  %1475 = vmatprep.subr.mxu0 0.0
  %1476 = vmatpush1.msra.mxu0 0.0
  %1477 = vmatprep.subr.mxu0 0.0
  %1478 = vmatpush1.msra.mxu0 0.0
  %1479 = vmatprep.subr.mxu0 0.0
  %1480 = vmatpush1.msra.mxu0 0.0
  %1481 = vmatprep.subr.mxu0 0.0
  %1482 = vmatpush1.msra.mxu0 0.0
  %1483 = vmatprep.subr.mxu0 0.0
  %1484 = vmatpush1.msra.mxu0 0.0
  %1485 = vmatprep.subr.mxu0 0.0
  %1486 = vmatpush1.msra.mxu0 0.0
  %1487 = vmatprep.subr.mxu0 0.0
  %1488 = vmatpush1.msra.mxu0 0.0
  %1489 = vmatprep.subr.mxu0 0.0
  %1490 = vmatpush1.msra.mxu0 0.0
  %1491 = vmatprep.subr.mxu0 0.0
  %1492 = vmatpush1.msra.mxu0 0.0
  %1493 = vmatprep.subr.mxu0 0.0
  %1494 = vmatpush1.msra.mxu0 0.0
  %1495 = vmatprep.subr.mxu0 0.0
  %1496 = vmatpush1.msra.mxu0 0.0
  %1497 = vmatprep.subr.mxu0 0.0
  %1498 = vmatpush1.msra.mxu0 0.0
  %1499 = vmatprep.mubr.f32.mxu0 0.0
  %1500 = vmatmul.mubr.f32.gmra.mrb[0].mxu0 %v1434
  %v1501 = vpop.f32.mrb[0].mxu0
  %v1502 = vadd.f32 0.0, %v1501
  %v1503 = vpop.f32.mrb[0].mxu0
  %1504 = vdwg.mxu0
  %v1505 = vmul.f32 %v1431, 0.125
  %v1506 = vmul.f32 %v1502, 0.125
  %v1507 = vmul.f32 %v1505, %v1505
  %v1508 = vsub.f32 %v1506, %v1507
  %v1509 = vadd.f32 %v1508, 1e-05
  %v1510 = vrsqrt.pop %v1509
  %1512 = vrot.lane.b32.xlu0 %v1510, 12
  %v1513 = vpop.permute.xlu0 %1512
  %v1515 = vmul.f32 %v1032, %v1513
  %1517 = vrot.lane.b32.xlu0 %v1515, 116
  %v1518 = vpop.permute.xlu0 %1517
  %v1520 = vmul.f32 %v1505, %v1518
  %1522 = vrot.lane.b32.xlu0 %v1520, 13
  %v1523 = vpop.permute.xlu0 %1522
  %v1525 = vsub.f32 %v1032, %v1523
  %1526 = vset.pattern.permute.xlu0 12
  %1527 = vperm.xlu0 %1526, %v1515
  %v1528 = vpop.permute.xlu0 %1527
  %v1530 = vmul.f32 %v1361, %v1528
  %1532 = vset.pattern.permute.xlu0 13
  %1533 = vperm.xlu0 %1532, %v1525
  %v1534 = vpop.permute.xlu0 %1533
  %v1536 = vadd.f32 %v1530, %v1534
  %v1537 = vmax.f32 %v1536, 0.0
  %1538 = vst [vmem:[%s3] sm:$0xff] %v1537
  // Predicated region
  $region14: #{test_forward.1} parent=0 // pred_check
    _
  $region15: #{test_forward.1} parent=0 // pred_check_branch
    %1540 = sbr.rel (0) target = $region17
  $region16: #{test_forward.1} parent=0 // pred_region
    _
  $region17: #{test_forward.1} parent=0 // pred_fallthru
    _
  // Predicated region
  $region18: #{test_forward.1} parent=0 // pred_check
    _
  $region19: #{test_forward.1} parent=0 // pred_check_branch
    %1542 = sbr.rel (0) target = $region21
  $region20: #{test_forward.1} parent=0 // pred_region
    _
  $region21: #{test_forward.1} parent=0 // pred_fallthru
    _

</llo_original>
